<compile_context>
chip_gen: v7x
topology: tpu7x:2x2x1
jax: 0.10.0
libtpu: 0.0.40
codegen_flags: <defaults>
</compile_context>

<pallas_src>
import functools
import math

import jax
import jax.numpy as jnp
from jax.experimental import pallas as pl
from jax.experimental.pallas import tpu as pltpu

_ITERS = 3
_SMOOTH = 1e-7


def _cldice_kernel(yt_ref, yp_ref, out_ref, *, iters, H, W):
    """One (batch, channel-group) tile.

    The ref holds a stack of independent HxW images, folded either along the
    sublane axis (rows = G*H, lanes = W) or along the lane axis (rows = H,
    lanes = G*W).  The `% H` / `% W` boundary masks cover both layouts and
    also block min/max leakage across packed images.
    """
    R, L = yt_ref.shape

    # Boundary masks: hoisted (data independent) and stored as broadcastable
    # (R,1)/(1,L) vectors instead of four full (R,L) boolean slabs.
    row = jax.lax.broadcasted_iota(jnp.int32, (R, 1), 0) % H
    col = jax.lax.broadcasted_iota(jnp.int32, (1, L), 1) % W
    m_top = row == 0          # no row above within this image
    m_bot = row == H - 1      # no row below within this image
    m_lft = col == 0          # no column to the left within this image
    m_rgt = col == W - 1      # no column to the right within this image

    pinf = jnp.float32(jnp.inf)
    ninf = jnp.float32(-jnp.inf)

    def shift(x, offset, axis, mask, fill):
        # y[i] = x[i + offset] along `axis`; out-of-bounds / cross-image
        # positions are replaced by `fill` (reproduces max_pool2d's implicit
        # +/-inf padding).  The roll rides the XLU slot; only the select
        # costs a VALU op.
        n = x.shape[axis]
        rolled = pltpu.roll(x, (-offset) % n, axis)
        return jnp.where(mask, fill, rolled)

    def soft_erode(img):
        # p1 = -max_pool2d(-img,(3,1),pad(1,0)); p2 = -max_pool2d(-img,(1,3),pad(0,1))
        up = shift(img, -1, 0, m_top, pinf)
        dn = shift(img, +1, 0, m_bot, pinf)
        p1 = jnp.minimum(jnp.minimum(img, up), dn)
        lf = shift(img, -1, 1, m_lft, pinf)
        rt = shift(img, +1, 1, m_rgt, pinf)
        p2 = jnp.minimum(jnp.minimum(img, lf), rt)
        return jnp.minimum(p1, p2)

    def soft_dilate(img):
        # max_pool2d(img,(3,3),pad(1,1)) computed separably (max is separable).
        up = shift(img, -1, 0, m_top, ninf)
        dn = shift(img, +1, 0, m_bot, ninf)
        v = jnp.maximum(jnp.maximum(img, up), dn)
        lf = shift(v, -1, 1, m_lft, ninf)
        rt = shift(v, +1, 1, m_rgt, ninf)
        return jnp.maximum(jnp.maximum(v, lf), rt)

    def relu(x):
        return jnp.maximum(x, 0.0)

    def soft_skel(img):
        # CSE'd skeleton: the erosion is shared between the opening and the
        # next iteration's image -> only iters+1 erosions total.
        e = soft_erode(img)
        skel = relu(img - soft_dilate(e))
        for _ in range(iters):
            img = e
            e = soft_erode(img)
            delta = relu(img - soft_dilate(e))
            skel = skel + relu(delta - skel * delta)
        return skel

    yt = yt_ref[...].astype(jnp.float32)
    yp = yp_ref[...].astype(jnp.float32)

    skel_pred = soft_skel(yp)
    skel_true = soft_skel(yt)

    # Partial sums for this (batch, channel-group) tile; channel 0 was dropped
    # host-side and zero-padded dummy channels contribute exactly 0.
    s0 = jnp.sum(skel_pred * yt, keepdims=True)   # (1, 1)
    s1 = jnp.sum(skel_pred, keepdims=True)
    s2 = jnp.sum(skel_true * yp, keepdims=True)
    s3 = jnp.sum(skel_true, keepdims=True)

    # Pack the four scalars into one (1, 4) vector -> a single output store.
    lane = jax.lax.broadcasted_iota(jnp.int32, (1, 4), 1)
    packed = jnp.where(lane == 0, s0,
             jnp.where(lane == 1, s1,
             jnp.where(lane == 2, s2, s3)))
    out_ref[...] = packed


def _tpu_generation():
    try:
        kind = jax.devices()[0].device_kind.lower()
    except Exception:
        return None
    for gen in (7, 6, 5, 4):
        if (f"v{gen}" in kind) or (f"tpu{gen}" in kind):
            return gen
    return None


def _vmem_limit_bytes(gen):
    # ~3/4 of physical per-core VMEM, leaving compiler-scratch headroom:
    # v5e/v6e -> 96 MiB (of 128 MiB), v7x -> 48 MiB (of 64 MiB).
    cap = None
    try:
        cap = getattr(pltpu.get_tpu_info(), "vmem_capacity_bytes", None)
    except Exception:
        cap = None
    if cap:
        cap = max(32 << 20, min(int(cap), 128 << 20))
    elif gen == 5 or gen == 6:
        cap = 128 << 20
    else:
        cap = 64 << 20   # v7x or unknown: stay conservative
    return cap * 3 // 4


def _choose_channel_grouping(Cm, H, W, in_dsize, vmem_limit):
    """Channels-per-grid-step G, padded channel count, and group count."""
    # ~14 live f32 slabs (inputs, skeleton state, erode/dilate temps) plus the
    # two double-buffered input tiles in their native dtype; 40% headroom.
    live_slabs = 14
    per_channel = H * W * (live_slabs * 4 + 2 * 2 * in_dsize)
    g_fit = max(1, int(0.6 * vmem_limit) // per_channel)

    if W >= 128:
        # Sublane packing: block rows = G*H must be a multiple of 8 (or full).
        g0 = 8 // math.gcd(H, 8)
    else:
        # Lane packing: block lanes = G*W must be a multiple of 128 (or full).
        g0 = 128 // math.gcd(W, 128)

    G = max(g0, (g_fit // g0) * g0)
    G = min(G, -(-Cm // g0) * g0)      # never more channels than needed
    Cm_pad = -(-Cm // G) * G           # pad channel count to a multiple of G
    return G, Cm_pad, Cm_pad // G


def _pack(x, Cm_pad, sublane_mode):
    # Drop channel 0 (the loss never uses it), keep the native dtype through
    # the HBM->VMEM DMA, pad with zero channels (numerically inert), and fold
    # the channel axis into sublanes (free reshape) or lanes (W < 128).
    N, C, H, W = x.shape
    x = x[:, 1:]
    Cm = C - 1
    if Cm_pad > Cm:
        x = jnp.concatenate(
            [x, jnp.zeros((N, Cm_pad - Cm, H, W), x.dtype)], axis=1)
    if sublane_mode:
        return x.reshape(N, Cm_pad * H, W)
    x = jnp.transpose(x, (0, 2, 1, 3))          # (N, H, Cm_pad, W)
    return x.reshape(N, H, Cm_pad * W)


def soft_cldice(y_true, y_pred, iters=_ITERS, smooth=_SMOOTH):
    assert y_true.shape == y_pred.shape and y_true.ndim == 4
    N, C, H, W = y_true.shape
    if C < 2:
        # torch.sum over the empty [:, 1:] slice is 0 -> tprec = tsens = 1 -> 0.
        return jnp.float32(0.0)
    Cm = C - 1

    gen = _tpu_generation()
    vmem_limit = _vmem_limit_bytes(gen)
    in_dsize = jnp.dtype(y_pred.dtype).itemsize
    G, Cm_pad, NG = _choose_channel_grouping(Cm, H, W, in_dsize, vmem_limit)

    sublane_mode = W >= 128
    yt = _pack(y_true, Cm_pad, sublane_mode)
    yp = _pack(y_pred, Cm_pad, sublane_mode)

    if sublane_mode:
        in_spec = pl.BlockSpec((None, G * H, W), lambda n, g: (n, g, 0))
    else:
        in_spec = pl.BlockSpec((None, H, G * W), lambda n, g: (n, 0, g))
    out_spec = pl.BlockSpec((None, 1, 4), lambda n, g, _ng=NG: (n * _ng + g, 0, 0))

    sums = pl.pallas_call(
        functools.partial(_cldice_kernel, iters=iters, H=H, W=W),
        grid=(N, NG),
        in_specs=[in_spec, in_spec],
        out_specs=out_spec,
        out_shape=jax.ShapeDtypeStruct((N * NG, 1, 4), jnp.float32),
        compiler_params=pltpu.CompilerParams(
            dimension_semantics=("parallel", "parallel"),
            vmem_limit_bytes=vmem_limit),
    )(yt, yp)

    s = jnp.sum(sums.reshape(N * NG, 4), axis=0)   # reduce over batch & groups
    tprec = (s[0] + smooth) / (s[1] + smooth)
    tsens = (s[2] + smooth) / (s[3] + smooth)
    cl_dice = 1.0 - 2.0 * (tprec * tsens) / (tprec + tsens)
    return cl_dice


if __name__ == "__main__":
    key = jax.random.PRNGKey(0)
    k1, k2 = jax.random.split(key)
    N, C, H, W = 2, 4, 16, 16
    # y_true: binarized "labels"; y_pred: soft probabilities in [0, 1].
    y_true = (jax.random.uniform(k1, (N, C, H, W)) > 0.5).astype(jnp.float32)
    y_pred = jax.random.uniform(k2, (N, C, H, W), dtype=jnp.float32)

    loss = jax.jit(soft_cldice)(y_true, y_pred)
    jax.block_until_ready(loss)
    print("KERNEL_OK")
</pallas_src>

<mosaic_0001>
module attributes {stable_mosaic.version = 11 : i64} {
  func.func @_cldice_kernel(%arg0: i32, %arg1: i32, %arg2: memref<1x16x128xf32, #tpu.memory_space<vmem>>, %arg3: memref<1x16x128xf32, #tpu.memory_space<vmem>>, %arg4: memref<1x1x4xf32, #tpu.memory_space<vmem>>) attributes {dimension_semantics = [#tpu.dimension_semantics<parallel>, #tpu.dimension_semantics<parallel>], iteration_bounds = array<i64: 2, 1>, scalar_prefetch = 0 : i64, scratch_operands = 0 : i64, tpu.core_type = #tpu.core_type<tc>, window_params = [{transform_indices = @transform_0, window_bounds = array<i64: 1, 16, 128>}, {transform_indices = @transform_1, window_bounds = array<i64: 1, 16, 128>}, {transform_indices = @transform_2, window_bounds = array<i64: 1, 1, 4>}]} {
    %0 = tpu.iota {dimensions = array<i32: 0>} : vector<16x1xi32>
    %c16_i32 = arith.constant 16 : i32
    %c0_i32 = arith.constant 0 : i32
    %1 = arith.cmpi eq, %c16_i32, %c0_i32 : i32
    %c1_i32 = arith.constant 1 : i32
    %2 = arith.select %1, %c1_i32, %c16_i32 : i32
    %3 = vector.broadcast %2 : i32 to vector<16x1xi32>
    %4 = arith.remsi %0, %3 : vector<16x1xi32>
    %c0_i32_0 = arith.constant 0 : i32
    %5 = vector.broadcast %c0_i32_0 : i32 to vector<16x1xi32>
    %6 = arith.cmpi ne, %4, %5 : vector<16x1xi32>
    %c0_i32_1 = arith.constant 0 : i32
    %7 = vector.broadcast %c0_i32_1 : i32 to vector<16x1xi32>
    %8 = arith.cmpi slt, %4, %7 : vector<16x1xi32>
    %c0_i32_2 = arith.constant 0 : i32
    %9 = arith.cmpi slt, %2, %c0_i32_2 : i32
    %10 = vector.broadcast %9 : i1 to vector<16x1xi1>
    %11 = vector.broadcast %10 : vector<16x1xi1> to vector<16x1xi1>
    %12 = arith.xori %8, %11 : vector<16x1xi1>
    %13 = arith.andi %12, %6 : vector<16x1xi1>
    %14 = vector.broadcast %2 : i32 to vector<16x1xi32>
    %15 = arith.addi %4, %14 : vector<16x1xi32>
    %16 = arith.select %13, %15, %4 : vector<16x1xi1>, vector<16x1xi32>
    %17 = tpu.iota {dimensions = array<i32: 1>} : vector<1x128xi32>
    %c16_i32_3 = arith.constant 16 : i32
    %c0_i32_4 = arith.constant 0 : i32
    %18 = arith.cmpi eq, %c16_i32_3, %c0_i32_4 : i32
    %c1_i32_5 = arith.constant 1 : i32
    %19 = arith.select %18, %c1_i32_5, %c16_i32_3 : i32
    %20 = vector.broadcast %19 : i32 to vector<1x128xi32>
    %21 = arith.remsi %17, %20 : vector<1x128xi32>
    %c0_i32_6 = arith.constant 0 : i32
    %22 = vector.broadcast %c0_i32_6 : i32 to vector<1x128xi32>
    %23 = arith.cmpi ne, %21, %22 : vector<1x128xi32>
    %c0_i32_7 = arith.constant 0 : i32
    %24 = vector.broadcast %c0_i32_7 : i32 to vector<1x128xi32>
    %25 = arith.cmpi slt, %21, %24 : vector<1x128xi32>
    %c0_i32_8 = arith.constant 0 : i32
    %26 = arith.cmpi slt, %19, %c0_i32_8 : i32
    %27 = vector.broadcast %26 : i1 to vector<1x128xi1>
    %28 = vector.broadcast %27 : vector<1x128xi1> to vector<1x128xi1>
    %29 = arith.xori %25, %28 : vector<1x128xi1>
    %30 = arith.andi %29, %23 : vector<1x128xi1>
    %31 = vector.broadcast %19 : i32 to vector<1x128xi32>
    %32 = arith.addi %21, %31 : vector<1x128xi32>
    %33 = arith.select %30, %32, %21 : vector<1x128xi1>, vector<1x128xi32>
    %c0_i32_9 = arith.constant 0 : i32
    %34 = vector.broadcast %c0_i32_9 : i32 to vector<16x1xi32>
    %35 = arith.cmpi eq, %16, %34 : vector<16x1xi32>
    %c15_i32 = arith.constant 15 : i32
    %36 = vector.broadcast %c15_i32 : i32 to vector<16x1xi32>
    %37 = arith.cmpi eq, %16, %36 : vector<16x1xi32>
    %c0_i32_10 = arith.constant 0 : i32
    %38 = vector.broadcast %c0_i32_10 : i32 to vector<1x128xi32>
    %39 = arith.cmpi eq, %33, %38 : vector<1x128xi32>
    %c15_i32_11 = arith.constant 15 : i32
    %40 = vector.broadcast %c15_i32_11 : i32 to vector<1x128xi32>
    %41 = arith.cmpi eq, %33, %40 : vector<1x128xi32>
    %c0 = arith.constant 0 : index
    %c0_12 = arith.constant 0 : index
    %c0_13 = arith.constant 0 : index
    %42 = vector.load %arg2[%c0, %c0_12, %c0_13] : memref<1x16x128xf32, #tpu.memory_space<vmem>>, vector<1x16x128xf32>
    %43 = vector.shape_cast %42 : vector<1x16x128xf32> to vector<16x128xf32>
    %c0_14 = arith.constant 0 : index
    %c0_15 = arith.constant 0 : index
    %c0_16 = arith.constant 0 : index
    %44 = vector.load %arg3[%c0_14, %c0_15, %c0_16] : memref<1x16x128xf32, #tpu.memory_space<vmem>>, vector<1x16x128xf32>
    %45 = vector.shape_cast %44 : vector<1x16x128xf32> to vector<16x128xf32>
    %c1_i32_17 = arith.constant 1 : i32
    %46 = tpu.dynamic_rotate %45 by %c1_i32_17 dim 0 : vector<16x128xf32>, i32 -> vector<16x128xf32>
    %cst = arith.constant 0x7F800000 : f32
    %47 = vector.shape_cast %35 : vector<16x1xi1> to vector<16x1xi1>
    %48 = vector.broadcast %47 : vector<16x1xi1> to vector<16x128xi1>
    %49 = vector.broadcast %cst : f32 to vector<16x128xf32>
    %50 = arith.select %48, %49, %46 : vector<16x128xi1>, vector<16x128xf32>
    %c15_i32_18 = arith.constant 15 : i32
    %51 = tpu.dynamic_rotate %45 by %c15_i32_18 dim 0 : vector<16x128xf32>, i32 -> vector<16x128xf32>
    %cst_19 = arith.constant 0x7F800000 : f32
    %52 = vector.shape_cast %37 : vector<16x1xi1> to vector<16x1xi1>
    %53 = vector.broadcast %52 : vector<16x1xi1> to vector<16x128xi1>
    %54 = vector.broadcast %cst_19 : f32 to vector<16x128xf32>
    %55 = arith.select %53, %54, %51 : vector<16x128xi1>, vector<16x128xf32>
    %56 = arith.minimumf %45, %50 : vector<16x128xf32>
    %57 = arith.minimumf %56, %55 : vector<16x128xf32>
    %c1_i32_20 = arith.constant 1 : i32
    %58 = tpu.dynamic_rotate %45 by %c1_i32_20 dim 1 : vector<16x128xf32>, i32 -> vector<16x128xf32>
    %cst_21 = arith.constant 0x7F800000 : f32
    %59 = vector.shape_cast %39 : vector<1x128xi1> to vector<1x128xi1>
    %60 = vector.broadcast %59 : vector<1x128xi1> to vector<16x128xi1>
    %61 = vector.broadcast %cst_21 : f32 to vector<16x128xf32>
    %62 = arith.select %60, %61, %58 : vector<16x128xi1>, vector<16x128xf32>
    %c127_i32 = arith.constant 127 : i32
    %63 = tpu.dynamic_rotate %45 by %c127_i32 dim 1 : vector<16x128xf32>, i32 -> vector<16x128xf32>
    %cst_22 = arith.constant 0x7F800000 : f32
    %64 = vector.shape_cast %41 : vector<1x128xi1> to vector<1x128xi1>
    %65 = vector.broadcast %64 : vector<1x128xi1> to vector<16x128xi1>
    %66 = vector.broadcast %cst_22 : f32 to vector<16x128xf32>
    %67 = arith.select %65, %66, %63 : vector<16x128xi1>, vector<16x128xf32>
    %68 = arith.minimumf %45, %62 : vector<16x128xf32>
    %69 = arith.minimumf %68, %67 : vector<16x128xf32>
    %70 = arith.minimumf %57, %69 : vector<16x128xf32>
    %c1_i32_23 = arith.constant 1 : i32
    %71 = tpu.dynamic_rotate %70 by %c1_i32_23 dim 0 : vector<16x128xf32>, i32 -> vector<16x128xf32>
    %cst_24 = arith.constant 0xFF800000 : f32
    %72 = vector.shape_cast %35 : vector<16x1xi1> to vector<16x1xi1>
    %73 = vector.broadcast %72 : vector<16x1xi1> to vector<16x128xi1>
    %74 = vector.broadcast %cst_24 : f32 to vector<16x128xf32>
    %75 = arith.select %73, %74, %71 : vector<16x128xi1>, vector<16x128xf32>
    %c15_i32_25 = arith.constant 15 : i32
    %76 = tpu.dynamic_rotate %70 by %c15_i32_25 dim 0 : vector<16x128xf32>, i32 -> vector<16x128xf32>
    %cst_26 = arith.constant 0xFF800000 : f32
    %77 = vector.shape_cast %37 : vector<16x1xi1> to vector<16x1xi1>
    %78 = vector.broadcast %77 : vector<16x1xi1> to vector<16x128xi1>
    %79 = vector.broadcast %cst_26 : f32 to vector<16x128xf32>
    %80 = arith.select %78, %79, %76 : vector<16x128xi1>, vector<16x128xf32>
    %81 = arith.maximumf %70, %75 : vector<16x128xf32>
    %82 = arith.maximumf %81, %80 : vector<16x128xf32>
    %c1_i32_27 = arith.constant 1 : i32
    %83 = tpu.dynamic_rotate %82 by %c1_i32_27 dim 1 : vector<16x128xf32>, i32 -> vector<16x128xf32>
    %cst_28 = arith.constant 0xFF800000 : f32
    %84 = vector.shape_cast %39 : vector<1x128xi1> to vector<1x128xi1>
    %85 = vector.broadcast %84 : vector<1x128xi1> to vector<16x128xi1>
    %86 = vector.broadcast %cst_28 : f32 to vector<16x128xf32>
    %87 = arith.select %85, %86, %83 : vector<16x128xi1>, vector<16x128xf32>
    %c127_i32_29 = arith.constant 127 : i32
    %88 = tpu.dynamic_rotate %82 by %c127_i32_29 dim 1 : vector<16x128xf32>, i32 -> vector<16x128xf32>
    %cst_30 = arith.constant 0xFF800000 : f32
    %89 = vector.shape_cast %41 : vector<1x128xi1> to vector<1x128xi1>
    %90 = vector.broadcast %89 : vector<1x128xi1> to vector<16x128xi1>
    %91 = vector.broadcast %cst_30 : f32 to vector<16x128xf32>
    %92 = arith.select %90, %91, %88 : vector<16x128xi1>, vector<16x128xf32>
    %93 = arith.maximumf %82, %87 : vector<16x128xf32>
    %94 = arith.maximumf %93, %92 : vector<16x128xf32>
    %95 = arith.subf %45, %94 : vector<16x128xf32>
    %cst_31 = arith.constant 0.000000e+00 : f32
    %96 = vector.broadcast %cst_31 : f32 to vector<16x128xf32>
    %97 = arith.maximumf %95, %96 : vector<16x128xf32>
    %c1_i32_32 = arith.constant 1 : i32
    %98 = tpu.dynamic_rotate %70 by %c1_i32_32 dim 0 : vector<16x128xf32>, i32 -> vector<16x128xf32>
    %cst_33 = arith.constant 0x7F800000 : f32
    %99 = vector.shape_cast %35 : vector<16x1xi1> to vector<16x1xi1>
    %100 = vector.broadcast %99 : vector<16x1xi1> to vector<16x128xi1>
    %101 = vector.broadcast %cst_33 : f32 to vector<16x128xf32>
    %102 = arith.select %100, %101, %98 : vector<16x128xi1>, vector<16x128xf32>
    %c15_i32_34 = arith.constant 15 : i32
    %103 = tpu.dynamic_rotate %70 by %c15_i32_34 dim 0 : vector<16x128xf32>, i32 -> vector<16x128xf32>
    %cst_35 = arith.constant 0x7F800000 : f32
    %104 = vector.shape_cast %37 : vector<16x1xi1> to vector<16x1xi1>
    %105 = vector.broadcast %104 : vector<16x1xi1> to vector<16x128xi1>
    %106 = vector.broadcast %cst_35 : f32 to vector<16x128xf32>
    %107 = arith.select %105, %106, %103 : vector<16x128xi1>, vector<16x128xf32>
    %108 = arith.minimumf %70, %102 : vector<16x128xf32>
    %109 = arith.minimumf %108, %107 : vector<16x128xf32>
    %c1_i32_36 = arith.constant 1 : i32
    %110 = tpu.dynamic_rotate %70 by %c1_i32_36 dim 1 : vector<16x128xf32>, i32 -> vector<16x128xf32>
    %cst_37 = arith.constant 0x7F800000 : f32
    %111 = vector.shape_cast %39 : vector<1x128xi1> to vector<1x128xi1>
    %112 = vector.broadcast %111 : vector<1x128xi1> to vector<16x128xi1>
    %113 = vector.broadcast %cst_37 : f32 to vector<16x128xf32>
    %114 = arith.select %112, %113, %110 : vector<16x128xi1>, vector<16x128xf32>
    %c127_i32_38 = arith.constant 127 : i32
    %115 = tpu.dynamic_rotate %70 by %c127_i32_38 dim 1 : vector<16x128xf32>, i32 -> vector<16x128xf32>
    %cst_39 = arith.constant 0x7F800000 : f32
    %116 = vector.shape_cast %41 : vector<1x128xi1> to vector<1x128xi1>
    %117 = vector.broadcast %116 : vector<1x128xi1> to vector<16x128xi1>
    %118 = vector.broadcast %cst_39 : f32 to vector<16x128xf32>
    %119 = arith.select %117, %118, %115 : vector<16x128xi1>, vector<16x128xf32>
    %120 = arith.minimumf %70, %114 : vector<16x128xf32>
    %121 = arith.minimumf %120, %119 : vector<16x128xf32>
    %122 = arith.minimumf %109, %121 : vector<16x128xf32>
    %c1_i32_40 = arith.constant 1 : i32
    %123 = tpu.dynamic_rotate %122 by %c1_i32_40 dim 0 : vector<16x128xf32>, i32 -> vector<16x128xf32>
    %cst_41 = arith.constant 0xFF800000 : f32
    %124 = vector.shape_cast %35 : vector<16x1xi1> to vector<16x1xi1>
    %125 = vector.broadcast %124 : vector<16x1xi1> to vector<16x128xi1>
    %126 = vector.broadcast %cst_41 : f32 to vector<16x128xf32>
    %127 = arith.select %125, %126, %123 : vector<16x128xi1>, vector<16x128xf32>
    %c15_i32_42 = arith.constant 15 : i32
    %128 = tpu.dynamic_rotate %122 by %c15_i32_42 dim 0 : vector<16x128xf32>, i32 -> vector<16x128xf32>
    %cst_43 = arith.constant 0xFF800000 : f32
    %129 = vector.shape_cast %37 : vector<16x1xi1> to vector<16x1xi1>
    %130 = vector.broadcast %129 : vector<16x1xi1> to vector<16x128xi1>
    %131 = vector.broadcast %cst_43 : f32 to vector<16x128xf32>
    %132 = arith.select %130, %131, %128 : vector<16x128xi1>, vector<16x128xf32>
    %133 = arith.maximumf %122, %127 : vector<16x128xf32>
    %134 = arith.maximumf %133, %132 : vector<16x128xf32>
    %c1_i32_44 = arith.constant 1 : i32
    %135 = tpu.dynamic_rotate %134 by %c1_i32_44 dim 1 : vector<16x128xf32>, i32 -> vector<16x128xf32>
    %cst_45 = arith.constant 0xFF800000 : f32
    %136 = vector.shape_cast %39 : vector<1x128xi1> to vector<1x128xi1>
    %137 = vector.broadcast %136 : vector<1x128xi1> to vector<16x128xi1>
    %138 = vector.broadcast %cst_45 : f32 to vector<16x128xf32>
    %139 = arith.select %137, %138, %135 : vector<16x128xi1>, vector<16x128xf32>
    %c127_i32_46 = arith.constant 127 : i32
    %140 = tpu.dynamic_rotate %134 by %c127_i32_46 dim 1 : vector<16x128xf32>, i32 -> vector<16x128xf32>
    %cst_47 = arith.constant 0xFF800000 : f32
    %141 = vector.shape_cast %41 : vector<1x128xi1> to vector<1x128xi1>
    %142 = vector.broadcast %141 : vector<1x128xi1> to vector<16x128xi1>
    %143 = vector.broadcast %cst_47 : f32 to vector<16x128xf32>
    %144 = arith.select %142, %143, %140 : vector<16x128xi1>, vector<16x128xf32>
    %145 = arith.maximumf %134, %139 : vector<16x128xf32>
    %146 = arith.maximumf %145, %144 : vector<16x128xf32>
    %147 = arith.subf %70, %146 : vector<16x128xf32>
    %cst_48 = arith.constant 0.000000e+00 : f32
    %148 = vector.broadcast %cst_48 : f32 to vector<16x128xf32>
    %149 = arith.maximumf %147, %148 : vector<16x128xf32>
    %150 = arith.mulf %97, %149 : vector<16x128xf32>
    %151 = arith.subf %149, %150 : vector<16x128xf32>
    %cst_49 = arith.constant 0.000000e+00 : f32
    %152 = vector.broadcast %cst_49 : f32 to vector<16x128xf32>
    %153 = arith.maximumf %151, %152 : vector<16x128xf32>
    %154 = arith.addf %97, %153 : vector<16x128xf32>
    %c1_i32_50 = arith.constant 1 : i32
    %155 = tpu.dynamic_rotate %122 by %c1_i32_50 dim 0 : vector<16x128xf32>, i32 -> vector<16x128xf32>
    %cst_51 = arith.constant 0x7F800000 : f32
    %156 = vector.shape_cast %35 : vector<16x1xi1> to vector<16x1xi1>
    %157 = vector.broadcast %156 : vector<16x1xi1> to vector<16x128xi1>
    %158 = vector.broadcast %cst_51 : f32 to vector<16x128xf32>
    %159 = arith.select %157, %158, %155 : vector<16x128xi1>, vector<16x128xf32>
    %c15_i32_52 = arith.constant 15 : i32
    %160 = tpu.dynamic_rotate %122 by %c15_i32_52 dim 0 : vector<16x128xf32>, i32 -> vector<16x128xf32>
    %cst_53 = arith.constant 0x7F800000 : f32
    %161 = vector.shape_cast %37 : vector<16x1xi1> to vector<16x1xi1>
    %162 = vector.broadcast %161 : vector<16x1xi1> to vector<16x128xi1>
    %163 = vector.broadcast %cst_53 : f32 to vector<16x128xf32>
    %164 = arith.select %162, %163, %160 : vector<16x128xi1>, vector<16x128xf32>
    %165 = arith.minimumf %122, %159 : vector<16x128xf32>
    %166 = arith.minimumf %165, %164 : vector<16x128xf32>
    %c1_i32_54 = arith.constant 1 : i32
    %167 = tpu.dynamic_rotate %122 by %c1_i32_54 dim 1 : vector<16x128xf32>, i32 -> vector<16x128xf32>
    %cst_55 = arith.constant 0x7F800000 : f32
    %168 = vector.shape_cast %39 : vector<1x128xi1> to vector<1x128xi1>
    %169 = vector.broadcast %168 : vector<1x128xi1> to vector<16x128xi1>
    %170 = vector.broadcast %cst_55 : f32 to vector<16x128xf32>
    %171 = arith.select %169, %170, %167 : vector<16x128xi1>, vector<16x128xf32>
    %c127_i32_56 = arith.constant 127 : i32
    %172 = tpu.dynamic_rotate %122 by %c127_i32_56 dim 1 : vector<16x128xf32>, i32 -> vector<16x128xf32>
    %cst_57 = arith.constant 0x7F800000 : f32
    %173 = vector.shape_cast %41 : vector<1x128xi1> to vector<1x128xi1>
    %174 = vector.broadcast %173 : vector<1x128xi1> to vector<16x128xi1>
    %175 = vector.broadcast %cst_57 : f32 to vector<16x128xf32>
    %176 = arith.select %174, %175, %172 : vector<16x128xi1>, vector<16x128xf32>
    %177 = arith.minimumf %122, %171 : vector<16x128xf32>
    %178 = arith.minimumf %177, %176 : vector<16x128xf32>
    %179 = arith.minimumf %166, %178 : vector<16x128xf32>
    %c1_i32_58 = arith.constant 1 : i32
    %180 = tpu.dynamic_rotate %179 by %c1_i32_58 dim 0 : vector<16x128xf32>, i32 -> vector<16x128xf32>
    %cst_59 = arith.constant 0xFF800000 : f32
    %181 = vector.shape_cast %35 : vector<16x1xi1> to vector<16x1xi1>
    %182 = vector.broadcast %181 : vector<16x1xi1> to vector<16x128xi1>
    %183 = vector.broadcast %cst_59 : f32 to vector<16x128xf32>
    %184 = arith.select %182, %183, %180 : vector<16x128xi1>, vector<16x128xf32>
    %c15_i32_60 = arith.constant 15 : i32
    %185 = tpu.dynamic_rotate %179 by %c15_i32_60 dim 0 : vector<16x128xf32>, i32 -> vector<16x128xf32>
    %cst_61 = arith.constant 0xFF800000 : f32
    %186 = vector.shape_cast %37 : vector<16x1xi1> to vector<16x1xi1>
    %187 = vector.broadcast %186 : vector<16x1xi1> to vector<16x128xi1>
    %188 = vector.broadcast %cst_61 : f32 to vector<16x128xf32>
    %189 = arith.select %187, %188, %185 : vector<16x128xi1>, vector<16x128xf32>
    %190 = arith.maximumf %179, %184 : vector<16x128xf32>
    %191 = arith.maximumf %190, %189 : vector<16x128xf32>
    %c1_i32_62 = arith.constant 1 : i32
    %192 = tpu.dynamic_rotate %191 by %c1_i32_62 dim 1 : vector<16x128xf32>, i32 -> vector<16x128xf32>
    %cst_63 = arith.constant 0xFF800000 : f32
    %193 = vector.shape_cast %39 : vector<1x128xi1> to vector<1x128xi1>
    %194 = vector.broadcast %193 : vector<1x128xi1> to vector<16x128xi1>
    %195 = vector.broadcast %cst_63 : f32 to vector<16x128xf32>
    %196 = arith.select %194, %195, %192 : vector<16x128xi1>, vector<16x128xf32>
    %c127_i32_64 = arith.constant 127 : i32
    %197 = tpu.dynamic_rotate %191 by %c127_i32_64 dim 1 : vector<16x128xf32>, i32 -> vector<16x128xf32>
    %cst_65 = arith.constant 0xFF800000 : f32
    %198 = vector.shape_cast %41 : vector<1x128xi1> to vector<1x128xi1>
    %199 = vector.broadcast %198 : vector<1x128xi1> to vector<16x128xi1>
    %200 = vector.broadcast %cst_65 : f32 to vector<16x128xf32>
    %201 = arith.select %199, %200, %197 : vector<16x128xi1>, vector<16x128xf32>
    %202 = arith.maximumf %191, %196 : vector<16x128xf32>
    %203 = arith.maximumf %202, %201 : vector<16x128xf32>
    %204 = arith.subf %122, %203 : vector<16x128xf32>
    %cst_66 = arith.constant 0.000000e+00 : f32
    %205 = vector.broadcast %cst_66 : f32 to vector<16x128xf32>
    %206 = arith.maximumf %204, %205 : vector<16x128xf32>
    %207 = arith.mulf %154, %206 : vector<16x128xf32>
    %208 = arith.subf %206, %207 : vector<16x128xf32>
    %cst_67 = arith.constant 0.000000e+00 : f32
    %209 = vector.broadcast %cst_67 : f32 to vector<16x128xf32>
    %210 = arith.maximumf %208, %209 : vector<16x128xf32>
    %211 = arith.addf %154, %210 : vector<16x128xf32>
    %c1_i32_68 = arith.constant 1 : i32
    %212 = tpu.dynamic_rotate %179 by %c1_i32_68 dim 0 : vector<16x128xf32>, i32 -> vector<16x128xf32>
    %cst_69 = arith.constant 0x7F800000 : f32
    %213 = vector.shape_cast %35 : vector<16x1xi1> to vector<16x1xi1>
    %214 = vector.broadcast %213 : vector<16x1xi1> to vector<16x128xi1>
    %215 = vector.broadcast %cst_69 : f32 to vector<16x128xf32>
    %216 = arith.select %214, %215, %212 : vector<16x128xi1>, vector<16x128xf32>
    %c15_i32_70 = arith.constant 15 : i32
    %217 = tpu.dynamic_rotate %179 by %c15_i32_70 dim 0 : vector<16x128xf32>, i32 -> vector<16x128xf32>
    %cst_71 = arith.constant 0x7F800000 : f32
    %218 = vector.shape_cast %37 : vector<16x1xi1> to vector<16x1xi1>
    %219 = vector.broadcast %218 : vector<16x1xi1> to vector<16x128xi1>
    %220 = vector.broadcast %cst_71 : f32 to vector<16x128xf32>
    %221 = arith.select %219, %220, %217 : vector<16x128xi1>, vector<16x128xf32>
    %222 = arith.minimumf %179, %216 : vector<16x128xf32>
    %223 = arith.minimumf %222, %221 : vector<16x128xf32>
    %c1_i32_72 = arith.constant 1 : i32
    %224 = tpu.dynamic_rotate %179 by %c1_i32_72 dim 1 : vector<16x128xf32>, i32 -> vector<16x128xf32>
    %cst_73 = arith.constant 0x7F800000 : f32
    %225 = vector.shape_cast %39 : vector<1x128xi1> to vector<1x128xi1>
    %226 = vector.broadcast %225 : vector<1x128xi1> to vector<16x128xi1>
    %227 = vector.broadcast %cst_73 : f32 to vector<16x128xf32>
    %228 = arith.select %226, %227, %224 : vector<16x128xi1>, vector<16x128xf32>
    %c127_i32_74 = arith.constant 127 : i32
    %229 = tpu.dynamic_rotate %179 by %c127_i32_74 dim 1 : vector<16x128xf32>, i32 -> vector<16x128xf32>
    %cst_75 = arith.constant 0x7F800000 : f32
    %230 = vector.shape_cast %41 : vector<1x128xi1> to vector<1x128xi1>
    %231 = vector.broadcast %230 : vector<1x128xi1> to vector<16x128xi1>
    %232 = vector.broadcast %cst_75 : f32 to vector<16x128xf32>
    %233 = arith.select %231, %232, %229 : vector<16x128xi1>, vector<16x128xf32>
    %234 = arith.minimumf %179, %228 : vector<16x128xf32>
    %235 = arith.minimumf %234, %233 : vector<16x128xf32>
    %236 = arith.minimumf %223, %235 : vector<16x128xf32>
    %c1_i32_76 = arith.constant 1 : i32
    %237 = tpu.dynamic_rotate %236 by %c1_i32_76 dim 0 : vector<16x128xf32>, i32 -> vector<16x128xf32>
    %cst_77 = arith.constant 0xFF800000 : f32
    %238 = vector.shape_cast %35 : vector<16x1xi1> to vector<16x1xi1>
    %239 = vector.broadcast %238 : vector<16x1xi1> to vector<16x128xi1>
    %240 = vector.broadcast %cst_77 : f32 to vector<16x128xf32>
    %241 = arith.select %239, %240, %237 : vector<16x128xi1>, vector<16x128xf32>
    %c15_i32_78 = arith.constant 15 : i32
    %242 = tpu.dynamic_rotate %236 by %c15_i32_78 dim 0 : vector<16x128xf32>, i32 -> vector<16x128xf32>
    %cst_79 = arith.constant 0xFF800000 : f32
    %243 = vector.shape_cast %37 : vector<16x1xi1> to vector<16x1xi1>
    %244 = vector.broadcast %243 : vector<16x1xi1> to vector<16x128xi1>
    %245 = vector.broadcast %cst_79 : f32 to vector<16x128xf32>
    %246 = arith.select %244, %245, %242 : vector<16x128xi1>, vector<16x128xf32>
    %247 = arith.maximumf %236, %241 : vector<16x128xf32>
    %248 = arith.maximumf %247, %246 : vector<16x128xf32>
    %c1_i32_80 = arith.constant 1 : i32
    %249 = tpu.dynamic_rotate %248 by %c1_i32_80 dim 1 : vector<16x128xf32>, i32 -> vector<16x128xf32>
    %cst_81 = arith.constant 0xFF800000 : f32
    %250 = vector.shape_cast %39 : vector<1x128xi1> to vector<1x128xi1>
    %251 = vector.broadcast %250 : vector<1x128xi1> to vector<16x128xi1>
    %252 = vector.broadcast %cst_81 : f32 to vector<16x128xf32>
    %253 = arith.select %251, %252, %249 : vector<16x128xi1>, vector<16x128xf32>
    %c127_i32_82 = arith.constant 127 : i32
    %254 = tpu.dynamic_rotate %248 by %c127_i32_82 dim 1 : vector<16x128xf32>, i32 -> vector<16x128xf32>
    %cst_83 = arith.constant 0xFF800000 : f32
    %255 = vector.shape_cast %41 : vector<1x128xi1> to vector<1x128xi1>
    %256 = vector.broadcast %255 : vector<1x128xi1> to vector<16x128xi1>
    %257 = vector.broadcast %cst_83 : f32 to vector<16x128xf32>
    %258 = arith.select %256, %257, %254 : vector<16x128xi1>, vector<16x128xf32>
    %259 = arith.maximumf %248, %253 : vector<16x128xf32>
    %260 = arith.maximumf %259, %258 : vector<16x128xf32>
    %261 = arith.subf %179, %260 : vector<16x128xf32>
    %cst_84 = arith.constant 0.000000e+00 : f32
    %262 = vector.broadcast %cst_84 : f32 to vector<16x128xf32>
    %263 = arith.maximumf %261, %262 : vector<16x128xf32>
    %264 = arith.mulf %211, %263 : vector<16x128xf32>
    %265 = arith.subf %263, %264 : vector<16x128xf32>
    %cst_85 = arith.constant 0.000000e+00 : f32
    %266 = vector.broadcast %cst_85 : f32 to vector<16x128xf32>
    %267 = arith.maximumf %265, %266 : vector<16x128xf32>
    %268 = arith.addf %211, %267 : vector<16x128xf32>
    %c1_i32_86 = arith.constant 1 : i32
    %269 = tpu.dynamic_rotate %43 by %c1_i32_86 dim 0 : vector<16x128xf32>, i32 -> vector<16x128xf32>
    %cst_87 = arith.constant 0x7F800000 : f32
    %270 = vector.shape_cast %35 : vector<16x1xi1> to vector<16x1xi1>
    %271 = vector.broadcast %270 : vector<16x1xi1> to vector<16x128xi1>
    %272 = vector.broadcast %cst_87 : f32 to vector<16x128xf32>
    %273 = arith.select %271, %272, %269 : vector<16x128xi1>, vector<16x128xf32>
    %c15_i32_88 = arith.constant 15 : i32
    %274 = tpu.dynamic_rotate %43 by %c15_i32_88 dim 0 : vector<16x128xf32>, i32 -> vector<16x128xf32>
    %cst_89 = arith.constant 0x7F800000 : f32
    %275 = vector.shape_cast %37 : vector<16x1xi1> to vector<16x1xi1>
    %276 = vector.broadcast %275 : vector<16x1xi1> to vector<16x128xi1>
    %277 = vector.broadcast %cst_89 : f32 to vector<16x128xf32>
    %278 = arith.select %276, %277, %274 : vector<16x128xi1>, vector<16x128xf32>
    %279 = arith.minimumf %43, %273 : vector<16x128xf32>
    %280 = arith.minimumf %279, %278 : vector<16x128xf32>
    %c1_i32_90 = arith.constant 1 : i32
    %281 = tpu.dynamic_rotate %43 by %c1_i32_90 dim 1 : vector<16x128xf32>, i32 -> vector<16x128xf32>
    %cst_91 = arith.constant 0x7F800000 : f32
    %282 = vector.shape_cast %39 : vector<1x128xi1> to vector<1x128xi1>
    %283 = vector.broadcast %282 : vector<1x128xi1> to vector<16x128xi1>
    %284 = vector.broadcast %cst_91 : f32 to vector<16x128xf32>
    %285 = arith.select %283, %284, %281 : vector<16x128xi1>, vector<16x128xf32>
    %c127_i32_92 = arith.constant 127 : i32
    %286 = tpu.dynamic_rotate %43 by %c127_i32_92 dim 1 : vector<16x128xf32>, i32 -> vector<16x128xf32>
    %cst_93 = arith.constant 0x7F800000 : f32
    %287 = vector.shape_cast %41 : vector<1x128xi1> to vector<1x128xi1>
    %288 = vector.broadcast %287 : vector<1x128xi1> to vector<16x128xi1>
    %289 = vector.broadcast %cst_93 : f32 to vector<16x128xf32>
    %290 = arith.select %288, %289, %286 : vector<16x128xi1>, vector<16x128xf32>
    %291 = arith.minimumf %43, %285 : vector<16x128xf32>
    %292 = arith.minimumf %291, %290 : vector<16x128xf32>
    %293 = arith.minimumf %280, %292 : vector<16x128xf32>
    %c1_i32_94 = arith.constant 1 : i32
    %294 = tpu.dynamic_rotate %293 by %c1_i32_94 dim 0 : vector<16x128xf32>, i32 -> vector<16x128xf32>
    %cst_95 = arith.constant 0xFF800000 : f32
    %295 = vector.shape_cast %35 : vector<16x1xi1> to vector<16x1xi1>
    %296 = vector.broadcast %295 : vector<16x1xi1> to vector<16x128xi1>
    %297 = vector.broadcast %cst_95 : f32 to vector<16x128xf32>
    %298 = arith.select %296, %297, %294 : vector<16x128xi1>, vector<16x128xf32>
    %c15_i32_96 = arith.constant 15 : i32
    %299 = tpu.dynamic_rotate %293 by %c15_i32_96 dim 0 : vector<16x128xf32>, i32 -> vector<16x128xf32>
    %cst_97 = arith.constant 0xFF800000 : f32
    %300 = vector.shape_cast %37 : vector<16x1xi1> to vector<16x1xi1>
    %301 = vector.broadcast %300 : vector<16x1xi1> to vector<16x128xi1>
    %302 = vector.broadcast %cst_97 : f32 to vector<16x128xf32>
    %303 = arith.select %301, %302, %299 : vector<16x128xi1>, vector<16x128xf32>
    %304 = arith.maximumf %293, %298 : vector<16x128xf32>
    %305 = arith.maximumf %304, %303 : vector<16x128xf32>
    %c1_i32_98 = arith.constant 1 : i32
    %306 = tpu.dynamic_rotate %305 by %c1_i32_98 dim 1 : vector<16x128xf32>, i32 -> vector<16x128xf32>
    %cst_99 = arith.constant 0xFF800000 : f32
    %307 = vector.shape_cast %39 : vector<1x128xi1> to vector<1x128xi1>
    %308 = vector.broadcast %307 : vector<1x128xi1> to vector<16x128xi1>
    %309 = vector.broadcast %cst_99 : f32 to vector<16x128xf32>
    %310 = arith.select %308, %309, %306 : vector<16x128xi1>, vector<16x128xf32>
    %c127_i32_100 = arith.constant 127 : i32
    %311 = tpu.dynamic_rotate %305 by %c127_i32_100 dim 1 : vector<16x128xf32>, i32 -> vector<16x128xf32>
    %cst_101 = arith.constant 0xFF800000 : f32
    %312 = vector.shape_cast %41 : vector<1x128xi1> to vector<1x128xi1>
    %313 = vector.broadcast %312 : vector<1x128xi1> to vector<16x128xi1>
    %314 = vector.broadcast %cst_101 : f32 to vector<16x128xf32>
    %315 = arith.select %313, %314, %311 : vector<16x128xi1>, vector<16x128xf32>
    %316 = arith.maximumf %305, %310 : vector<16x128xf32>
    %317 = arith.maximumf %316, %315 : vector<16x128xf32>
    %318 = arith.subf %43, %317 : vector<16x128xf32>
    %cst_102 = arith.constant 0.000000e+00 : f32
    %319 = vector.broadcast %cst_102 : f32 to vector<16x128xf32>
    %320 = arith.maximumf %318, %319 : vector<16x128xf32>
    %c1_i32_103 = arith.constant 1 : i32
    %321 = tpu.dynamic_rotate %293 by %c1_i32_103 dim 0 : vector<16x128xf32>, i32 -> vector<16x128xf32>
    %cst_104 = arith.constant 0x7F800000 : f32
    %322 = vector.shape_cast %35 : vector<16x1xi1> to vector<16x1xi1>
    %323 = vector.broadcast %322 : vector<16x1xi1> to vector<16x128xi1>
    %324 = vector.broadcast %cst_104 : f32 to vector<16x128xf32>
    %325 = arith.select %323, %324, %321 : vector<16x128xi1>, vector<16x128xf32>
    %c15_i32_105 = arith.constant 15 : i32
    %326 = tpu.dynamic_rotate %293 by %c15_i32_105 dim 0 : vector<16x128xf32>, i32 -> vector<16x128xf32>
    %cst_106 = arith.constant 0x7F800000 : f32
    %327 = vector.shape_cast %37 : vector<16x1xi1> to vector<16x1xi1>
    %328 = vector.broadcast %327 : vector<16x1xi1> to vector<16x128xi1>
    %329 = vector.broadcast %cst_106 : f32 to vector<16x128xf32>
    %330 = arith.select %328, %329, %326 : vector<16x128xi1>, vector<16x128xf32>
    %331 = arith.minimumf %293, %325 : vector<16x128xf32>
    %332 = arith.minimumf %331, %330 : vector<16x128xf32>
    %c1_i32_107 = arith.constant 1 : i32
    %333 = tpu.dynamic_rotate %293 by %c1_i32_107 dim 1 : vector<16x128xf32>, i32 -> vector<16x128xf32>
    %cst_108 = arith.constant 0x7F800000 : f32
    %334 = vector.shape_cast %39 : vector<1x128xi1> to vector<1x128xi1>
    %335 = vector.broadcast %334 : vector<1x128xi1> to vector<16x128xi1>
    %336 = vector.broadcast %cst_108 : f32 to vector<16x128xf32>
    %337 = arith.select %335, %336, %333 : vector<16x128xi1>, vector<16x128xf32>
    %c127_i32_109 = arith.constant 127 : i32
    %338 = tpu.dynamic_rotate %293 by %c127_i32_109 dim 1 : vector<16x128xf32>, i32 -> vector<16x128xf32>
    %cst_110 = arith.constant 0x7F800000 : f32
    %339 = vector.shape_cast %41 : vector<1x128xi1> to vector<1x128xi1>
    %340 = vector.broadcast %339 : vector<1x128xi1> to vector<16x128xi1>
    %341 = vector.broadcast %cst_110 : f32 to vector<16x128xf32>
    %342 = arith.select %340, %341, %338 : vector<16x128xi1>, vector<16x128xf32>
    %343 = arith.minimumf %293, %337 : vector<16x128xf32>
    %344 = arith.minimumf %343, %342 : vector<16x128xf32>
    %345 = arith.minimumf %332, %344 : vector<16x128xf32>
    %c1_i32_111 = arith.constant 1 : i32
    %346 = tpu.dynamic_rotate %345 by %c1_i32_111 dim 0 : vector<16x128xf32>, i32 -> vector<16x128xf32>
    %cst_112 = arith.constant 0xFF800000 : f32
    %347 = vector.shape_cast %35 : vector<16x1xi1> to vector<16x1xi1>
    %348 = vector.broadcast %347 : vector<16x1xi1> to vector<16x128xi1>
    %349 = vector.broadcast %cst_112 : f32 to vector<16x128xf32>
    %350 = arith.select %348, %349, %346 : vector<16x128xi1>, vector<16x128xf32>
    %c15_i32_113 = arith.constant 15 : i32
    %351 = tpu.dynamic_rotate %345 by %c15_i32_113 dim 0 : vector<16x128xf32>, i32 -> vector<16x128xf32>
    %cst_114 = arith.constant 0xFF800000 : f32
    %352 = vector.shape_cast %37 : vector<16x1xi1> to vector<16x1xi1>
    %353 = vector.broadcast %352 : vector<16x1xi1> to vector<16x128xi1>
    %354 = vector.broadcast %cst_114 : f32 to vector<16x128xf32>
    %355 = arith.select %353, %354, %351 : vector<16x128xi1>, vector<16x128xf32>
    %356 = arith.maximumf %345, %350 : vector<16x128xf32>
    %357 = arith.maximumf %356, %355 : vector<16x128xf32>
    %c1_i32_115 = arith.constant 1 : i32
    %358 = tpu.dynamic_rotate %357 by %c1_i32_115 dim 1 : vector<16x128xf32>, i32 -> vector<16x128xf32>
    %cst_116 = arith.constant 0xFF800000 : f32
    %359 = vector.shape_cast %39 : vector<1x128xi1> to vector<1x128xi1>
    %360 = vector.broadcast %359 : vector<1x128xi1> to vector<16x128xi1>
    %361 = vector.broadcast %cst_116 : f32 to vector<16x128xf32>
    %362 = arith.select %360, %361, %358 : vector<16x128xi1>, vector<16x128xf32>
    %c127_i32_117 = arith.constant 127 : i32
    %363 = tpu.dynamic_rotate %357 by %c127_i32_117 dim 1 : vector<16x128xf32>, i32 -> vector<16x128xf32>
    %cst_118 = arith.constant 0xFF800000 : f32
    %364 = vector.shape_cast %41 : vector<1x128xi1> to vector<1x128xi1>
    %365 = vector.broadcast %364 : vector<1x128xi1> to vector<16x128xi1>
    %366 = vector.broadcast %cst_118 : f32 to vector<16x128xf32>
    %367 = arith.select %365, %366, %363 : vector<16x128xi1>, vector<16x128xf32>
    %368 = arith.maximumf %357, %362 : vector<16x128xf32>
    %369 = arith.maximumf %368, %367 : vector<16x128xf32>
    %370 = arith.subf %293, %369 : vector<16x128xf32>
    %cst_119 = arith.constant 0.000000e+00 : f32
    %371 = vector.broadcast %cst_119 : f32 to vector<16x128xf32>
    %372 = arith.maximumf %370, %371 : vector<16x128xf32>
    %373 = arith.mulf %320, %372 : vector<16x128xf32>
    %374 = arith.subf %372, %373 : vector<16x128xf32>
    %cst_120 = arith.constant 0.000000e+00 : f32
    %375 = vector.broadcast %cst_120 : f32 to vector<16x128xf32>
    %376 = arith.maximumf %374, %375 : vector<16x128xf32>
    %377 = arith.addf %320, %376 : vector<16x128xf32>
    %c1_i32_121 = arith.constant 1 : i32
    %378 = tpu.dynamic_rotate %345 by %c1_i32_121 dim 0 : vector<16x128xf32>, i32 -> vector<16x128xf32>
    %cst_122 = arith.constant 0x7F800000 : f32
    %379 = vector.shape_cast %35 : vector<16x1xi1> to vector<16x1xi1>
    %380 = vector.broadcast %379 : vector<16x1xi1> to vector<16x128xi1>
    %381 = vector.broadcast %cst_122 : f32 to vector<16x128xf32>
    %382 = arith.select %380, %381, %378 : vector<16x128xi1>, vector<16x128xf32>
    %c15_i32_123 = arith.constant 15 : i32
    %383 = tpu.dynamic_rotate %345 by %c15_i32_123 dim 0 : vector<16x128xf32>, i32 -> vector<16x128xf32>
    %cst_124 = arith.constant 0x7F800000 : f32
    %384 = vector.shape_cast %37 : vector<16x1xi1> to vector<16x1xi1>
    %385 = vector.broadcast %384 : vector<16x1xi1> to vector<16x128xi1>
    %386 = vector.broadcast %cst_124 : f32 to vector<16x128xf32>
    %387 = arith.select %385, %386, %383 : vector<16x128xi1>, vector<16x128xf32>
    %388 = arith.minimumf %345, %382 : vector<16x128xf32>
    %389 = arith.minimumf %388, %387 : vector<16x128xf32>
    %c1_i32_125 = arith.constant 1 : i32
    %390 = tpu.dynamic_rotate %345 by %c1_i32_125 dim 1 : vector<16x128xf32>, i32 -> vector<16x128xf32>
    %cst_126 = arith.constant 0x7F800000 : f32
    %391 = vector.shape_cast %39 : vector<1x128xi1> to vector<1x128xi1>
    %392 = vector.broadcast %391 : vector<1x128xi1> to vector<16x128xi1>
    %393 = vector.broadcast %cst_126 : f32 to vector<16x128xf32>
    %394 = arith.select %392, %393, %390 : vector<16x128xi1>, vector<16x128xf32>
    %c127_i32_127 = arith.constant 127 : i32
    %395 = tpu.dynamic_rotate %345 by %c127_i32_127 dim 1 : vector<16x128xf32>, i32 -> vector<16x128xf32>
    %cst_128 = arith.constant 0x7F800000 : f32
    %396 = vector.shape_cast %41 : vector<1x128xi1> to vector<1x128xi1>
    %397 = vector.broadcast %396 : vector<1x128xi1> to vector<16x128xi1>
    %398 = vector.broadcast %cst_128 : f32 to vector<16x128xf32>
    %399 = arith.select %397, %398, %395 : vector<16x128xi1>, vector<16x128xf32>
    %400 = arith.minimumf %345, %394 : vector<16x128xf32>
    %401 = arith.minimumf %400, %399 : vector<16x128xf32>
    %402 = arith.minimumf %389, %401 : vector<16x128xf32>
    %c1_i32_129 = arith.constant 1 : i32
    %403 = tpu.dynamic_rotate %402 by %c1_i32_129 dim 0 : vector<16x128xf32>, i32 -> vector<16x128xf32>
    %cst_130 = arith.constant 0xFF800000 : f32
    %404 = vector.shape_cast %35 : vector<16x1xi1> to vector<16x1xi1>
    %405 = vector.broadcast %404 : vector<16x1xi1> to vector<16x128xi1>
    %406 = vector.broadcast %cst_130 : f32 to vector<16x128xf32>
    %407 = arith.select %405, %406, %403 : vector<16x128xi1>, vector<16x128xf32>
    %c15_i32_131 = arith.constant 15 : i32
    %408 = tpu.dynamic_rotate %402 by %c15_i32_131 dim 0 : vector<16x128xf32>, i32 -> vector<16x128xf32>
    %cst_132 = arith.constant 0xFF800000 : f32
    %409 = vector.shape_cast %37 : vector<16x1xi1> to vector<16x1xi1>
    %410 = vector.broadcast %409 : vector<16x1xi1> to vector<16x128xi1>
    %411 = vector.broadcast %cst_132 : f32 to vector<16x128xf32>
    %412 = arith.select %410, %411, %408 : vector<16x128xi1>, vector<16x128xf32>
    %413 = arith.maximumf %402, %407 : vector<16x128xf32>
    %414 = arith.maximumf %413, %412 : vector<16x128xf32>
    %c1_i32_133 = arith.constant 1 : i32
    %415 = tpu.dynamic_rotate %414 by %c1_i32_133 dim 1 : vector<16x128xf32>, i32 -> vector<16x128xf32>
    %cst_134 = arith.constant 0xFF800000 : f32
    %416 = vector.shape_cast %39 : vector<1x128xi1> to vector<1x128xi1>
    %417 = vector.broadcast %416 : vector<1x128xi1> to vector<16x128xi1>
    %418 = vector.broadcast %cst_134 : f32 to vector<16x128xf32>
    %419 = arith.select %417, %418, %415 : vector<16x128xi1>, vector<16x128xf32>
    %c127_i32_135 = arith.constant 127 : i32
    %420 = tpu.dynamic_rotate %414 by %c127_i32_135 dim 1 : vector<16x128xf32>, i32 -> vector<16x128xf32>
    %cst_136 = arith.constant 0xFF800000 : f32
    %421 = vector.shape_cast %41 : vector<1x128xi1> to vector<1x128xi1>
    %422 = vector.broadcast %421 : vector<1x128xi1> to vector<16x128xi1>
    %423 = vector.broadcast %cst_136 : f32 to vector<16x128xf32>
    %424 = arith.select %422, %423, %420 : vector<16x128xi1>, vector<16x128xf32>
    %425 = arith.maximumf %414, %419 : vector<16x128xf32>
    %426 = arith.maximumf %425, %424 : vector<16x128xf32>
    %427 = arith.subf %345, %426 : vector<16x128xf32>
    %cst_137 = arith.constant 0.000000e+00 : f32
    %428 = vector.broadcast %cst_137 : f32 to vector<16x128xf32>
    %429 = arith.maximumf %427, %428 : vector<16x128xf32>
    %430 = arith.mulf %377, %429 : vector<16x128xf32>
    %431 = arith.subf %429, %430 : vector<16x128xf32>
    %cst_138 = arith.constant 0.000000e+00 : f32
    %432 = vector.broadcast %cst_138 : f32 to vector<16x128xf32>
    %433 = arith.maximumf %431, %432 : vector<16x128xf32>
    %434 = arith.addf %377, %433 : vector<16x128xf32>
    %c1_i32_139 = arith.constant 1 : i32
    %435 = tpu.dynamic_rotate %402 by %c1_i32_139 dim 0 : vector<16x128xf32>, i32 -> vector<16x128xf32>
    %cst_140 = arith.constant 0x7F800000 : f32
    %436 = vector.shape_cast %35 : vector<16x1xi1> to vector<16x1xi1>
    %437 = vector.broadcast %436 : vector<16x1xi1> to vector<16x128xi1>
    %438 = vector.broadcast %cst_140 : f32 to vector<16x128xf32>
    %439 = arith.select %437, %438, %435 : vector<16x128xi1>, vector<16x128xf32>
    %c15_i32_141 = arith.constant 15 : i32
    %440 = tpu.dynamic_rotate %402 by %c15_i32_141 dim 0 : vector<16x128xf32>, i32 -> vector<16x128xf32>
    %cst_142 = arith.constant 0x7F800000 : f32
    %441 = vector.shape_cast %37 : vector<16x1xi1> to vector<16x1xi1>
    %442 = vector.broadcast %441 : vector<16x1xi1> to vector<16x128xi1>
    %443 = vector.broadcast %cst_142 : f32 to vector<16x128xf32>
    %444 = arith.select %442, %443, %440 : vector<16x128xi1>, vector<16x128xf32>
    %445 = arith.minimumf %402, %439 : vector<16x128xf32>
    %446 = arith.minimumf %445, %444 : vector<16x128xf32>
    %c1_i32_143 = arith.constant 1 : i32
    %447 = tpu.dynamic_rotate %402 by %c1_i32_143 dim 1 : vector<16x128xf32>, i32 -> vector<16x128xf32>
    %cst_144 = arith.constant 0x7F800000 : f32
    %448 = vector.shape_cast %39 : vector<1x128xi1> to vector<1x128xi1>
    %449 = vector.broadcast %448 : vector<1x128xi1> to vector<16x128xi1>
    %450 = vector.broadcast %cst_144 : f32 to vector<16x128xf32>
    %451 = arith.select %449, %450, %447 : vector<16x128xi1>, vector<16x128xf32>
    %c127_i32_145 = arith.constant 127 : i32
    %452 = tpu.dynamic_rotate %402 by %c127_i32_145 dim 1 : vector<16x128xf32>, i32 -> vector<16x128xf32>
    %cst_146 = arith.constant 0x7F800000 : f32
    %453 = vector.shape_cast %41 : vector<1x128xi1> to vector<1x128xi1>
    %454 = vector.broadcast %453 : vector<1x128xi1> to vector<16x128xi1>
    %455 = vector.broadcast %cst_146 : f32 to vector<16x128xf32>
    %456 = arith.select %454, %455, %452 : vector<16x128xi1>, vector<16x128xf32>
    %457 = arith.minimumf %402, %451 : vector<16x128xf32>
    %458 = arith.minimumf %457, %456 : vector<16x128xf32>
    %459 = arith.minimumf %446, %458 : vector<16x128xf32>
    %c1_i32_147 = arith.constant 1 : i32
    %460 = tpu.dynamic_rotate %459 by %c1_i32_147 dim 0 : vector<16x128xf32>, i32 -> vector<16x128xf32>
    %cst_148 = arith.constant 0xFF800000 : f32
    %461 = vector.shape_cast %35 : vector<16x1xi1> to vector<16x1xi1>
    %462 = vector.broadcast %461 : vector<16x1xi1> to vector<16x128xi1>
    %463 = vector.broadcast %cst_148 : f32 to vector<16x128xf32>
    %464 = arith.select %462, %463, %460 : vector<16x128xi1>, vector<16x128xf32>
    %c15_i32_149 = arith.constant 15 : i32
    %465 = tpu.dynamic_rotate %459 by %c15_i32_149 dim 0 : vector<16x128xf32>, i32 -> vector<16x128xf32>
    %cst_150 = arith.constant 0xFF800000 : f32
    %466 = vector.shape_cast %37 : vector<16x1xi1> to vector<16x1xi1>
    %467 = vector.broadcast %466 : vector<16x1xi1> to vector<16x128xi1>
    %468 = vector.broadcast %cst_150 : f32 to vector<16x128xf32>
    %469 = arith.select %467, %468, %465 : vector<16x128xi1>, vector<16x128xf32>
    %470 = arith.maximumf %459, %464 : vector<16x128xf32>
    %471 = arith.maximumf %470, %469 : vector<16x128xf32>
    %c1_i32_151 = arith.constant 1 : i32
    %472 = tpu.dynamic_rotate %471 by %c1_i32_151 dim 1 : vector<16x128xf32>, i32 -> vector<16x128xf32>
    %cst_152 = arith.constant 0xFF800000 : f32
    %473 = vector.shape_cast %39 : vector<1x128xi1> to vector<1x128xi1>
    %474 = vector.broadcast %473 : vector<1x128xi1> to vector<16x128xi1>
    %475 = vector.broadcast %cst_152 : f32 to vector<16x128xf32>
    %476 = arith.select %474, %475, %472 : vector<16x128xi1>, vector<16x128xf32>
    %c127_i32_153 = arith.constant 127 : i32
    %477 = tpu.dynamic_rotate %471 by %c127_i32_153 dim 1 : vector<16x128xf32>, i32 -> vector<16x128xf32>
    %cst_154 = arith.constant 0xFF800000 : f32
    %478 = vector.shape_cast %41 : vector<1x128xi1> to vector<1x128xi1>
    %479 = vector.broadcast %478 : vector<1x128xi1> to vector<16x128xi1>
    %480 = vector.broadcast %cst_154 : f32 to vector<16x128xf32>
    %481 = arith.select %479, %480, %477 : vector<16x128xi1>, vector<16x128xf32>
    %482 = arith.maximumf %471, %476 : vector<16x128xf32>
    %483 = arith.maximumf %482, %481 : vector<16x128xf32>
    %484 = arith.subf %402, %483 : vector<16x128xf32>
    %cst_155 = arith.constant 0.000000e+00 : f32
    %485 = vector.broadcast %cst_155 : f32 to vector<16x128xf32>
    %486 = arith.maximumf %484, %485 : vector<16x128xf32>
    %487 = arith.mulf %434, %486 : vector<16x128xf32>
    %488 = arith.subf %486, %487 : vector<16x128xf32>
    %cst_156 = arith.constant 0.000000e+00 : f32
    %489 = vector.broadcast %cst_156 : f32 to vector<16x128xf32>
    %490 = arith.maximumf %488, %489 : vector<16x128xf32>
    %491 = arith.addf %434, %490 : vector<16x128xf32>
    %492 = arith.mulf %268, %43 : vector<16x128xf32>
    %493 = vector.shape_cast %492 : vector<16x128xf32> to vector<1x16x128xf32>
    %cst_157 = arith.constant dense<0.000000e+00> : vector<1xf32>
    %494 = vector.multi_reduction <add>, %493, %cst_157 [1, 2] : vector<1x16x128xf32> to vector<1xf32>
    %495 = vector.shape_cast %494 : vector<1xf32> to vector<1x1x1xf32>
    %496 = vector.extract %495[0, 0, 0] : f32 from vector<1x1x1xf32>
    %497 = vector.broadcast %496 : f32 to vector<1x1xf32>
    %498 = vector.shape_cast %268 : vector<16x128xf32> to vector<1x16x128xf32>
    %cst_158 = arith.constant dense<0.000000e+00> : vector<1xf32>
    %499 = vector.multi_reduction <add>, %498, %cst_158 [1, 2] : vector<1x16x128xf32> to vector<1xf32>
    %500 = vector.shape_cast %499 : vector<1xf32> to vector<1x1x1xf32>
    %501 = vector.extract %500[0, 0, 0] : f32 from vector<1x1x1xf32>
    %502 = vector.broadcast %501 : f32 to vector<1x1xf32>
    %503 = arith.mulf %491, %45 : vector<16x128xf32>
    %504 = vector.shape_cast %503 : vector<16x128xf32> to vector<1x16x128xf32>
    %cst_159 = arith.constant dense<0.000000e+00> : vector<1xf32>
    %505 = vector.multi_reduction <add>, %504, %cst_159 [1, 2] : vector<1x16x128xf32> to vector<1xf32>
    %506 = vector.shape_cast %505 : vector<1xf32> to vector<1x1x1xf32>
    %507 = vector.extract %506[0, 0, 0] : f32 from vector<1x1x1xf32>
    %508 = vector.broadcast %507 : f32 to vector<1x1xf32>
    %509 = vector.shape_cast %491 : vector<16x128xf32> to vector<1x16x128xf32>
    %cst_160 = arith.constant dense<0.000000e+00> : vector<1xf32>
    %510 = vector.multi_reduction <add>, %509, %cst_160 [1, 2] : vector<1x16x128xf32> to vector<1xf32>
    %511 = vector.shape_cast %510 : vector<1xf32> to vector<1x1x1xf32>
    %512 = vector.extract %511[0, 0, 0] : f32 from vector<1x1x1xf32>
    %513 = vector.broadcast %512 : f32 to vector<1x1xf32>
    %514 = tpu.iota {dimensions = array<i32: 1>} : vector<1x4xi32>
    %c0_i32_161 = arith.constant 0 : i32
    %515 = vector.broadcast %c0_i32_161 : i32 to vector<1x4xi32>
    %516 = arith.cmpi eq, %514, %515 : vector<1x4xi32>
    %c1_i32_162 = arith.constant 1 : i32
    %517 = vector.broadcast %c1_i32_162 : i32 to vector<1x4xi32>
    %518 = arith.cmpi eq, %514, %517 : vector<1x4xi32>
    %c2_i32 = arith.constant 2 : i32
    %519 = vector.broadcast %c2_i32 : i32 to vector<1x4xi32>
    %520 = arith.cmpi eq, %514, %519 : vector<1x4xi32>
    %521 = vector.shape_cast %508 : vector<1x1xf32> to vector<1x1xf32>
    %522 = vector.broadcast %521 : vector<1x1xf32> to vector<1x4xf32>
    %523 = vector.shape_cast %513 : vector<1x1xf32> to vector<1x1xf32>
    %524 = vector.broadcast %523 : vector<1x1xf32> to vector<1x4xf32>
    %525 = arith.select %520, %522, %524 : vector<1x4xi1>, vector<1x4xf32>
    %526 = vector.shape_cast %502 : vector<1x1xf32> to vector<1x1xf32>
    %527 = vector.broadcast %526 : vector<1x1xf32> to vector<1x4xf32>
    %528 = arith.select %518, %527, %525 : vector<1x4xi1>, vector<1x4xf32>
    %529 = vector.shape_cast %497 : vector<1x1xf32> to vector<1x1xf32>
    %530 = vector.broadcast %529 : vector<1x1xf32> to vector<1x4xf32>
    %531 = arith.select %516, %530, %528 : vector<1x4xi1>, vector<1x4xf32>
    %c0_163 = arith.constant 0 : index
    %c0_164 = arith.constant 0 : index
    %c0_165 = arith.constant 0 : index
    %532 = vector.load %arg4[%c0_163, %c0_164, %c0_165] : memref<1x1x4xf32, #tpu.memory_space<vmem>>, vector<1x1x4xf32>
    %533 = vector.shape_cast %532 : vector<1x1x4xf32> to vector<1x4xf32>
    %534 = vector.shape_cast %531 : vector<1x4xf32> to vector<1x1x4xf32>
    tpu.vector_store %arg4[%c0_163, %c0_164, %c0_165], %534 {strides = array<i32>} : memref<1x1x4xf32, #tpu.memory_space<vmem>>, vector<1x1x4xf32>,
    return
  }
  func.func @transform_0(%arg0: i32, %arg1: i32) -> (i32, i32, i32) {
    %c0_i32 = arith.constant 0 : i32
    %c0_i32_0 = arith.constant 0 : i32
    return %arg0, %c0_i32, %arg1 : i32, i32, i32
  }
  func.func @transform_1(%arg0: i32, %arg1: i32) -> (i32, i32, i32) {
    %c0_i32 = arith.constant 0 : i32
    %c0_i32_0 = arith.constant 0 : i32
    return %arg0, %c0_i32, %arg1 : i32, i32, i32
  }
  func.func @transform_2(%arg0: i32, %arg1: i32) -> (i32, i32, i32) {
    %c1_i32 = arith.constant 1 : i32
    %0 = arith.muli %arg0, %c1_i32 : i32
    %1 = arith.addi %0, %arg1 : i32
    %c0_i32 = arith.constant 0 : i32
    %c0_i32_0 = arith.constant 0 : i32
    %c0_i32_1 = arith.constant 0 : i32
    return %1, %c0_i32, %c0_i32_0 : i32, i32, i32
  }
}

</mosaic_0001>

<llo_original>
// kernel: soft_cldice.1
$region0: #{soft_cldice.1}
  #allocation0 [shape = 'u32[]', space=smem, size = 0x4, offset = 0x4, fixed_abs, tag = 'smem constant byte address 0x4 - core index']
  #allocation1 [shape = 'u32[144,128]{1,0:T(1,128)}', space=vmem, size = 0x12000, scoped, tag = 'internal scratch']
  %s0 = inlined_call_operand.vmem [shape: f32[2,16,128], index: 0, kind: input, shape index: {}]
  %s1 = inlined_call_operand.vmem [shape: f32[2,16,128], index: 1, kind: input, shape index: {}]
  %s2 = inlined_call_operand.vmem [shape: f32[2,1,4], index: 2, kind: output, shape index: {}]
  %s3 = sld [smem:[#allocation0]]
  $region41: #{soft_cldice.1} parent=0
    _
  %s5 = ssub.s32 1, %s3
  %s6 = scalar_select 0, %s5, %s3
  loop: start=0, step=1, limit=4
  $region2: #{soft_cldice.1} parent=0 // loop_pre_header
    _
  $region3: #{soft_cldice.1} parent=0 // loop_header
    %s8 = sphi 0, %s12
    %p9 = scmp.ge.s32.totalorder %s8, 4
    %s15 = sphi 0, %s27
    %s16 = sphi 0, %s23
    %s17 = sphi 0, %s15
    %s18 = sphi 0, %s16
    %s19 = sphi 0, %s17
    %s20 = sphi 0, %s18
    %s32 = sphi 0, %s34
    %s35 = sphi 0, %s32
    %s36 = sphi 0, %s35
    %s52 = sphi 0, %s36
    %s60 = sphi 0, %s62
    %s63 = sphi 0, %s60
    %s64 = sphi 0, %s63
    %s80 = sphi 0, %s64
    %s88 = sphi 0, %s90
    %s91 = sphi 0, %s88
    %s92 = sphi 0, %s91
    %s108 = sphi 0, %s92
  $region4: #{soft_cldice.1} parent=0 // loop_header_branch
    %11 = sbr.rel (%p9) target = $region8
  $region5: #{soft_cldice.1} parent=0 // loop_body
    %s13 = ssub.s32 %s8, 1
    %s14 = ssub.s32 %s8, 2
    %s21 = sadd.s32 1, %s16
    %p22 = scmp.ge.s32.totalorder %s21, 1
    %s23 = scalar_select %p22, 0, %s21
    %s24 = sadd.s32 1, %s15
    %s25 = scalar_select %p22, %s24, %s15
    %p26 = scmp.ge.s32.totalorder %s25, 2
    %s27 = scalar_select %p26, 0, %s25
    %s28 = ssub.s32 %s15, %s27
    %s29 = ssub.s32 %s16, %s23
    %s30 = sor.u32 %s28, %s29
    %p31 = scmp.eq.s32.totalorder %s30, 0
    %s33 = sadd.s32 %s32, 1
    %s34 = scalar_select %p31, %s32, %s33
    %p37 = pneg %p31
    %p38 = scmp.eq.s32.totalorder %s8, 1
    %p39 = por %p37, %p38
    %p40 = scmp.ne.s32.totalorder %s32, %s35
    %p41 = scmp.eq.s32.totalorder %s8, 0
    %p42 = por %p40, %p41
    %p43 = scmp.ne.s32.totalorder %s32, %s35
    %p44 = scmp.eq.s32.totalorder %s13, 1
    %p45 = por %p43, %p44
    %p46 = scmp.ne.s32.totalorder %s35, %s36
    %p47 = scmp.eq.s32.totalorder %s13, 0
    %p48 = por %p46, %p47
    %p49 = scmp.ne.s32.totalorder %s35, %s36
    %p50 = scmp.eq.s32.totalorder %s14, 1
    %p51 = por %p49, %p50
    %p53 = scmp.ne.s32.totalorder %s36, %s52
    %p54 = scmp.eq.s32.totalorder %s14, 0
    %p55 = por %p53, %p54
    %s56 = ssub.s32 %s15, %s27
    %s57 = ssub.s32 %s16, %s23
    %s58 = sor.u32 %s56, %s57
    %p59 = scmp.eq.s32.totalorder %s58, 0
    %s61 = sadd.s32 %s60, 1
    %s62 = scalar_select %p59, %s60, %s61
    %p65 = pneg %p59
    %p66 = scmp.eq.s32.totalorder %s8, 1
    %p67 = por %p65, %p66
    %p68 = scmp.ne.s32.totalorder %s60, %s63
    %p69 = scmp.eq.s32.totalorder %s8, 0
    %p70 = por %p68, %p69
    %p71 = scmp.ne.s32.totalorder %s60, %s63
    %p72 = scmp.eq.s32.totalorder %s13, 1
    %p73 = por %p71, %p72
    %p74 = scmp.ne.s32.totalorder %s63, %s64
    %p75 = scmp.eq.s32.totalorder %s13, 0
    %p76 = por %p74, %p75
    %p77 = scmp.ne.s32.totalorder %s63, %s64
    %p78 = scmp.eq.s32.totalorder %s14, 1
    %p79 = por %p77, %p78
    %p81 = scmp.ne.s32.totalorder %s64, %s80
    %p82 = scmp.eq.s32.totalorder %s14, 0
    %p83 = por %p81, %p82
    %s84 = sadd.s32 %s15, %s16
    %s85 = sadd.s32 %s27, %s23
    %s86 = ssub.s32 %s84, %s85
    %p87 = scmp.eq.s32.totalorder %s86, 0
    %s89 = sadd.s32 %s88, 1
    %s90 = scalar_select %p87, %s88, %s89
    %p93 = pneg %p87
    %p94 = scmp.eq.s32.totalorder %s8, 1
    %p95 = por %p93, %p94
    %p96 = scmp.ne.s32.totalorder %s88, %s91
    %p97 = scmp.eq.s32.totalorder %s8, 0
    %p98 = por %p96, %p97
    %p99 = scmp.ne.s32.totalorder %s88, %s91
    %p100 = scmp.eq.s32.totalorder %s13, 1
    %p101 = por %p99, %p100
    %p102 = scmp.ne.s32.totalorder %s91, %s92
    %p103 = scmp.eq.s32.totalorder %s13, 0
    %p104 = por %p102, %p103
    %p105 = scmp.ne.s32.totalorder %s91, %s92
    %p106 = scmp.eq.s32.totalorder %s14, 1
    %p107 = por %p105, %p106
    %p109 = scmp.ne.s32.totalorder %s92, %s108
    %p110 = scmp.eq.s32.totalorder %s14, 0
    %p111 = por %p109, %p110
    %p112 = scmp.le.s32.totalorder 1, %s8
    %p113 = scmp.lt.s32.totalorder %s8, 3
    %p114 = pnand %p112, %p113
    %p115 = pneg %p114
    // Predicated region
    $region9: #{soft_cldice.1} parent=5 // pred_check
      _
    $region10: #{soft_cldice.1} parent=5 // pred_check_branch
      %117 = sbr.rel (%p114) target = $region12
    $region11: #{soft_cldice.1} parent=5 // pred_region
      %s118 = ssub.s32 %s8, 1
    $region12: #{soft_cldice.1} parent=5 // pred_fallthru
      _
    %p119 = scmp.lt.s32.totalorder %s8, 2
    // Predicated region
    $region13: #{soft_cldice.1} parent=5 // pred_check
      %p120 = pneg %p119
    $region14: #{soft_cldice.1} parent=5 // pred_check_branch
      %122 = sbr.rel (%p120) target = $region16
    $region15: #{soft_cldice.1} parent=5 // pred_region
      // Predicated region
      $region17: #{soft_cldice.1} parent=15 // pred_check
        %p123 = pneg %p42
      $region18: #{soft_cldice.1} parent=15 // pred_check_branch
        %125 = sbr.rel (%p123) target = $region20
      $region19: #{soft_cldice.1} parent=15 // pred_region
        %p126 = scmp.lt.s32.totalorder %s15, 1
        %s127 = scalar_select %p126, %s15, 1
        %p128 = scmp.lt.s32.totalorder %s16, 0
        %s129 = scalar_select %p128, %s16, 0
        %s130 = smul.addr %s127, 2
        %s131 = sadd.s32 %s129, %s130
        %s132 = smul.addr %s131, 8
        %s133 = scalar_lea.vmem %s0, %s132
      $region20: #{soft_cldice.1} parent=15 // pred_fallthru
        _
      // Predicated region
      $region21: #{soft_cldice.1} parent=15 // pred_check
        %p134 = pneg %p70
      $region22: #{soft_cldice.1} parent=15 // pred_check_branch
        %136 = sbr.rel (%p134) target = $region24
      $region23: #{soft_cldice.1} parent=15 // pred_region
        %p137 = scmp.lt.s32.totalorder %s15, 1
        %s138 = scalar_select %p137, %s15, 1
        %p139 = scmp.lt.s32.totalorder %s16, 0
        %s140 = scalar_select %p139, %s16, 0
        %s141 = smul.addr %s138, 2
        %s142 = sadd.s32 %s140, %s141
        %s143 = smul.addr %s142, 8
        %s144 = scalar_lea.vmem %s1, %s143
      $region24: #{soft_cldice.1} parent=15 // pred_fallthru
        _
    $region16: #{soft_cldice.1} parent=5 // pred_fallthru
      _
    %p145 = scmp.le.s32.totalorder 1, %s8
    %p146 = scmp.lt.s32.totalorder %s8, 3
    %p147 = pnand %p145, %p146
    %p148 = pneg %p147
    // Predicated region
    $region25: #{soft_cldice.1} parent=5 // pred_check
      _
    $region26: #{soft_cldice.1} parent=5 // pred_check_branch
      %150 = sbr.rel (%p147) target = $region28
    $region27: #{soft_cldice.1} parent=5 // pred_region
      %s151 = ssub.s32 %s8, 1
      %p152 = scmp.lt.s32.totalorder %s17, 1
      %s153 = scalar_select %p152, %s17, 1
      %p154 = scmp.lt.s32.totalorder %s18, 0
      %s155 = scalar_select %p154, %s18, 0
      %s156 = smul.addr %s153, 2
      %s157 = sadd.s32 %s155, %s156
      %s158 = smul.addr %s157, 8
      %s159 = scalar_lea.vmem %s0, %s158
      %p160 = pneg %p48
      %p161 = pneg %p45
      %p162 = scmp.lt.s32.totalorder %s17, 1
      %s163 = scalar_select %p162, %s17, 1
      %p164 = scmp.lt.s32.totalorder %s18, 0
      %s165 = scalar_select %p164, %s18, 0
      %s166 = smul.addr %s163, 2
      %s167 = sadd.s32 %s165, %s166
      %s168 = smul.addr %s167, 8
      %s169 = scalar_lea.vmem %s1, %s168
      %p170 = pneg %p76
      %p171 = pneg %p73
      %p172 = pneg %p104
      %p173 = pneg %p101
      %s174 = sadd.s32 %s17, %s18
      %p175 = scmp.lt.s32.totalorder %s174, 1
      %s176 = scalar_select %p175, %s174, 1
      %s177 = scalar_lea.vmem %s2, %s176
      %p178 = scmp.lt.s32.totalorder %s17, 1
      %s179 = scalar_select %p178, %s17, 1
      %p180 = scmp.lt.s32.totalorder %s18, 0
      %s181 = scalar_select %p180, %s18, 0
      %s182 = smul.addr %s179, 2
      %s183 = sadd.s32 %s181, %s182
      %s184 = smul.addr %s183, 8
      %s185 = scalar_lea.vmem %s0, %s184
      %p186 = scmp.lt.s32.totalorder %s17, 1
      %s187 = scalar_select %p186, %s17, 1
      %p188 = scmp.lt.s32.totalorder %s18, 0
      %s189 = scalar_select %p188, %s18, 0
      %s190 = smul.addr %s187, 2
      %s191 = sadd.s32 %s189, %s190
      %s192 = smul.addr %s191, 8
      %s193 = scalar_lea.vmem %s1, %s192
      %s194 = sadd.s32 %s17, %s18
      %p195 = scmp.lt.s32.totalorder %s194, 1
      %s196 = scalar_select %p195, %s194, 1
      %s197 = scalar_lea.vmem %s2, %s196
      %s198 = sadd.s32 %s17, %s18
      %v199 = vlaneseq
      %v200 = vshrl.u32 %v199, 7
      %v201 = vadd.s32 %v200, 8
      %vm202 = vcmp.lt.s32.totalorder %v200, 0
      %v203 = vsub.s32 0, %v200
      %v204 = vsel %vm202, %v203, %v200
      %v205 = vshrl.u32 %v204, 4
      %v206 = vand.u32 %v204, 15
      %v207 = vsub.s32 0, %v206
      %v208 = vsel %vm202, %v207, %v206
      %vm209 = vcmp.lt.s32.totalorder %v201, 0
      %v210 = vsub.s32 0, %v201
      %v211 = vsel %vm209, %v210, %v201
      %v212 = vshrl.u32 %v211, 4
      %v213 = vand.u32 %v211, 15
      %v214 = vsub.s32 0, %v213
      %v215 = vsel %vm209, %v214, %v213
      %vm216 = vcmp.ne.s32.totalorder %v208, 0
      %vm217 = vcmp.ne.s32.totalorder %v215, 0
      %vm218 = vcmp.lt.s32.totalorder %v208, 0
      %vm219 = vcmp.lt.s32.totalorder %v215, 0
      %vm220 = vmand %vm218, %vm216
      %vm221 = vmand %vm219, %vm217
      %v222 = vadd.s32 %v208, 16
      %v223 = vadd.s32 %v215, 16
      %v224 = vsel %vm220, %v222, %v208
      %v225 = vsel %vm221, %v223, %v215
      %v226 = vlaneseq
      %v227 = vand.u32 %v226, 127
      %vm228 = vcmp.lt.s32.totalorder %v227, 0
      %v229 = vsub.s32 0, %v227
      %v230 = vsel %vm228, %v229, %v227
      %v231 = vshrl.u32 %v230, 4
      %v232 = vand.u32 %v230, 15
      %v233 = vsub.s32 0, %v232
      %v234 = vsel %vm228, %v233, %v232
      %vm235 = vcmp.ne.s32.totalorder %v234, 0
      %vm236 = vcmp.lt.s32.totalorder %v234, 0
      %vm237 = vmand %vm236, %vm235
      %v238 = vadd.s32 %v234, 16
      %v239 = vsel %vm237, %v238, %v234
      %vm240 = vcmp.eq.s32.totalorder %v224, 0
      %vm241 = vcmp.eq.s32.totalorder %v225, 0
      %vm242 = vcmp.eq.s32.totalorder %v224, 15
      %vm243 = vcmp.eq.s32.totalorder %v225, 15
      %vm244 = vcmp.eq.s32.totalorder %v239, 0
      %vm245 = vcmp.eq.s32.totalorder %v239, 15
      %v246 = vld [vmem:[%s185] sm:$0xff]
      %v247 = vld [vmem:[%s185 + $0x8] sm:$0xff]
      %v248 = vld [vmem:[%s193] sm:$0xff]
      %v249 = vld [vmem:[%s193 + $0x8] sm:$0xff]
      %v250 = vrot.slane %v248, 7
      %v251 = vrot.slane %v249, 7
      %vm252 = vcmp.lt.s32.totalorder %v200, 1
      %v253 = vsel %vm252, %v250, %v251
      %v254 = vsel %vm252, %v251, %v250
      %v255 = vsel %vm240, 1, 0
      %v256 = vsel %vm241, 1, 0
      %vm257 = vcmp.eq.s32.totalorder %v255, 1
      %vm258 = vcmp.eq.s32.totalorder %v256, 1
      %v259 = vsel %vm257, inf, %v254
      %v260 = vsel %vm258, inf, %v253
      %v261 = vrot.slane %v248, 1
      %v262 = vrot.slane %v249, 1
      %vm263 = vcmp.lt.s32.totalorder %v200, 7
      %v264 = vsel %vm263, %v261, %v262
      %v265 = vsel %vm263, %v262, %v261
      %v266 = vsel %vm242, 1, 0
      %v267 = vsel %vm243, 1, 0
      %vm268 = vcmp.eq.s32.totalorder %v266, 1
      %vm269 = vcmp.eq.s32.totalorder %v267, 1
      %v270 = vsel %vm268, inf, %v264
      %v271 = vsel %vm269, inf, %v265
      %v272 = vmin.f32 %v248, %v259
      %v273 = vmin.f32 %v249, %v260
      %v274 = vmin.f32 %v272, %v270
      %v275 = vmin.f32 %v273, %v271
      %276 = vrot.lane.b32.xlu0 %v248, 1
      %v277 = vpop.permute.xlu0 %276
      %278 = vrot.lane.b32.xlu0 %v249, 1
      %v279 = vpop.permute.xlu0 %278
      %v280 = vsel %vm244, 1, 0
      %vm281 = vcmp.eq.s32.totalorder %v280, 1
      %v282 = vsel %vm281, inf, %v277
      %v283 = vsel %vm281, inf, %v279
      %284 = vrot.lane.b32.xlu0 %v248, 127
      %v285 = vpop.permute.xlu0 %284
      %286 = vrot.lane.b32.xlu0 %v249, 127
      %v287 = vpop.permute.xlu0 %286
      %v288 = vsel %vm245, 1, 0
      %vm289 = vcmp.eq.s32.totalorder %v288, 1
      %v290 = vsel %vm289, inf, %v285
      %v291 = vsel %vm289, inf, %v287
      %v292 = vmin.f32 %v248, %v282
      %v293 = vmin.f32 %v249, %v283
      %v294 = vmin.f32 %v292, %v290
      %v295 = vmin.f32 %v293, %v291
      %v296 = vmin.f32 %v274, %v294
      %v297 = vmin.f32 %v275, %v295
      %v298 = vrot.slane %v296, 7
      %v299 = vrot.slane %v297, 7
      %v300 = vsel %vm252, %v298, %v299
      %v301 = vsel %vm252, %v299, %v298
      %v302 = vsel %vm257, -inf, %v301
      %v303 = vsel %vm258, -inf, %v300
      %v304 = vrot.slane %v296, 1
      %v305 = vrot.slane %v297, 1
      %v306 = vsel %vm263, %v304, %v305
      %v307 = vsel %vm263, %v305, %v304
      %v308 = vsel %vm268, -inf, %v306
      %v309 = vsel %vm269, -inf, %v307
      %v310 = vmax.f32 %v296, %v302
      %v311 = vmax.f32 %v297, %v303
      %v312 = vmax.f32 %v310, %v308
      %v313 = vmax.f32 %v311, %v309
      %314 = vrot.lane.b32.xlu0 %v312, 1
      %v315 = vpop.permute.xlu0 %314
      %316 = vrot.lane.b32.xlu0 %v313, 1
      %v317 = vpop.permute.xlu0 %316
      %v318 = vsel %vm281, -inf, %v315
      %v319 = vsel %vm281, -inf, %v317
      %320 = vrot.lane.b32.xlu0 %v312, 127
      %v321 = vpop.permute.xlu0 %320
      %322 = vrot.lane.b32.xlu0 %v313, 127
      %v323 = vpop.permute.xlu0 %322
      %v324 = vsel %vm289, -inf, %v321
      %v325 = vsel %vm289, -inf, %v323
      %v326 = vmax.f32 %v312, %v318
      %v327 = vmax.f32 %v313, %v319
      %v328 = vmax.f32 %v326, %v324
      %v329 = vmax.f32 %v327, %v325
      %v330 = vsub.f32 %v248, %v328
      %v331 = vsub.f32 %v249, %v329
      %v332 = vmax.f32 %v330, 0.0
      %v333 = vmax.f32 %v331, 0.0
      %v334 = vsel %vm257, inf, %v301
      %v335 = vsel %vm258, inf, %v300
      %v336 = vsel %vm268, inf, %v306
      %v337 = vsel %vm269, inf, %v307
      %v338 = vmin.f32 %v296, %v334
      %v339 = vmin.f32 %v297, %v335
      %v340 = vmin.f32 %v338, %v336
      %v341 = vmin.f32 %v339, %v337
      %342 = vrot.lane.b32.xlu0 %v296, 1
      %v343 = vpop.permute.xlu0 %342
      %344 = vrot.lane.b32.xlu0 %v297, 1
      %v345 = vpop.permute.xlu0 %344
      %v346 = vsel %vm281, inf, %v343
      %v347 = vsel %vm281, inf, %v345
      %348 = vrot.lane.b32.xlu0 %v296, 127
      %v349 = vpop.permute.xlu0 %348
      %350 = vrot.lane.b32.xlu0 %v297, 127
      %v351 = vpop.permute.xlu0 %350
      %v352 = vsel %vm289, inf, %v349
      %v353 = vsel %vm289, inf, %v351
      %v354 = vmin.f32 %v296, %v346
      %v355 = vmin.f32 %v297, %v347
      %v356 = vmin.f32 %v354, %v352
      %v357 = vmin.f32 %v355, %v353
      %v358 = vmin.f32 %v340, %v356
      %v359 = vmin.f32 %v341, %v357
      %v360 = vrot.slane %v358, 7
      %v361 = vrot.slane %v359, 7
      %v362 = vsel %vm252, %v360, %v361
      %v363 = vsel %vm252, %v361, %v360
      %v364 = vsel %vm257, -inf, %v363
      %v365 = vsel %vm258, -inf, %v362
      %v366 = vrot.slane %v358, 1
      %v367 = vrot.slane %v359, 1
      %v368 = vsel %vm263, %v366, %v367
      %v369 = vsel %vm263, %v367, %v366
      %v370 = vsel %vm268, -inf, %v368
      %v371 = vsel %vm269, -inf, %v369
      %v372 = vmax.f32 %v358, %v364
      %v373 = vmax.f32 %v359, %v365
      %v374 = vmax.f32 %v372, %v370
      %v375 = vmax.f32 %v373, %v371
      %376 = vrot.lane.b32.xlu0 %v374, 1
      %v377 = vpop.permute.xlu0 %376
      %378 = vrot.lane.b32.xlu0 %v375, 1
      %v379 = vpop.permute.xlu0 %378
      %v380 = vsel %vm281, -inf, %v377
      %v381 = vsel %vm281, -inf, %v379
      %382 = vrot.lane.b32.xlu0 %v374, 127
      %v383 = vpop.permute.xlu0 %382
      %384 = vrot.lane.b32.xlu0 %v375, 127
      %v385 = vpop.permute.xlu0 %384
      %v386 = vsel %vm289, -inf, %v383
      %v387 = vsel %vm289, -inf, %v385
      %v388 = vmax.f32 %v374, %v380
      %v389 = vmax.f32 %v375, %v381
      %v390 = vmax.f32 %v388, %v386
      %v391 = vmax.f32 %v389, %v387
      %v392 = vsub.f32 %v296, %v390
      %v393 = vsub.f32 %v297, %v391
      %v394 = vmax.f32 %v392, 0.0
      %v395 = vmax.f32 %v393, 0.0
      %v396 = vmul.f32 %v332, %v394
      %v397 = vmul.f32 %v333, %v395
      %v398 = vsub.f32 %v394, %v396
      %v399 = vsub.f32 %v395, %v397
      %v400 = vmax.f32 %v398, 0.0
      %v401 = vmax.f32 %v399, 0.0
      %v402 = vadd.f32 %v332, %v400
      %v403 = vadd.f32 %v333, %v401
      %v404 = vsel %vm257, inf, %v363
      %v405 = vsel %vm258, inf, %v362
      %v406 = vsel %vm268, inf, %v368
      %v407 = vsel %vm269, inf, %v369
      %v408 = vmin.f32 %v358, %v404
      %v409 = vmin.f32 %v359, %v405
      %v410 = vmin.f32 %v408, %v406
      %v411 = vmin.f32 %v409, %v407
      %412 = vrot.lane.b32.xlu0 %v358, 1
      %v413 = vpop.permute.xlu0 %412
      %414 = vrot.lane.b32.xlu0 %v359, 1
      %v415 = vpop.permute.xlu0 %414
      %v416 = vsel %vm281, inf, %v413
      %v417 = vsel %vm281, inf, %v415
      %418 = vrot.lane.b32.xlu0 %v358, 127
      %v419 = vpop.permute.xlu0 %418
      %420 = vrot.lane.b32.xlu0 %v359, 127
      %v421 = vpop.permute.xlu0 %420
      %v422 = vsel %vm289, inf, %v419
      %v423 = vsel %vm289, inf, %v421
      %v424 = vmin.f32 %v358, %v416
      %v425 = vmin.f32 %v359, %v417
      %v426 = vmin.f32 %v424, %v422
      %v427 = vmin.f32 %v425, %v423
      %v428 = vmin.f32 %v410, %v426
      %v429 = vmin.f32 %v411, %v427
      %v430 = vrot.slane %v428, 7
      %v431 = vrot.slane %v429, 7
      %v432 = vsel %vm252, %v430, %v431
      %v433 = vsel %vm252, %v431, %v430
      %v434 = vsel %vm257, -inf, %v433
      %v435 = vsel %vm258, -inf, %v432
      %v436 = vrot.slane %v428, 1
      %v437 = vrot.slane %v429, 1
      %v438 = vsel %vm263, %v436, %v437
      %v439 = vsel %vm263, %v437, %v436
      %v440 = vsel %vm268, -inf, %v438
      %v441 = vsel %vm269, -inf, %v439
      %v442 = vmax.f32 %v428, %v434
      %v443 = vmax.f32 %v429, %v435
      %v444 = vmax.f32 %v442, %v440
      %v445 = vmax.f32 %v443, %v441
      %446 = vrot.lane.b32.xlu0 %v444, 1
      %v447 = vpop.permute.xlu0 %446
      %448 = vrot.lane.b32.xlu0 %v445, 1
      %v449 = vpop.permute.xlu0 %448
      %v450 = vsel %vm281, -inf, %v447
      %v451 = vsel %vm281, -inf, %v449
      %452 = vrot.lane.b32.xlu0 %v444, 127
      %v453 = vpop.permute.xlu0 %452
      %454 = vrot.lane.b32.xlu0 %v445, 127
      %v455 = vpop.permute.xlu0 %454
      %v456 = vsel %vm289, -inf, %v453
      %v457 = vsel %vm289, -inf, %v455
      %v458 = vmax.f32 %v444, %v450
      %v459 = vmax.f32 %v445, %v451
      %v460 = vmax.f32 %v458, %v456
      %v461 = vmax.f32 %v459, %v457
      %v462 = vsub.f32 %v358, %v460
      %v463 = vsub.f32 %v359, %v461
      %v464 = vmax.f32 %v462, 0.0
      %v465 = vmax.f32 %v463, 0.0
      %v466 = vmul.f32 %v402, %v464
      %v467 = vmul.f32 %v403, %v465
      %v468 = vsub.f32 %v464, %v466
      %v469 = vsub.f32 %v465, %v467
      %v470 = vmax.f32 %v468, 0.0
      %v471 = vmax.f32 %v469, 0.0
      %v472 = vadd.f32 %v402, %v470
      %v473 = vadd.f32 %v403, %v471
      %v474 = vsel %vm257, inf, %v433
      %v475 = vsel %vm258, inf, %v432
      %v476 = vsel %vm268, inf, %v438
      %v477 = vsel %vm269, inf, %v439
      %v478 = vmin.f32 %v428, %v474
      %v479 = vmin.f32 %v429, %v475
      %v480 = vmin.f32 %v478, %v476
      %v481 = vmin.f32 %v479, %v477
      %482 = vrot.lane.b32.xlu0 %v428, 1
      %v483 = vpop.permute.xlu0 %482
      %484 = vrot.lane.b32.xlu0 %v429, 1
      %v485 = vpop.permute.xlu0 %484
      %v486 = vsel %vm281, inf, %v483
      %v487 = vsel %vm281, inf, %v485
      %488 = vrot.lane.b32.xlu0 %v428, 127
      %v489 = vpop.permute.xlu0 %488
      %490 = vrot.lane.b32.xlu0 %v429, 127
      %v491 = vpop.permute.xlu0 %490
      %v492 = vsel %vm289, inf, %v489
      %v493 = vsel %vm289, inf, %v491
      %v494 = vmin.f32 %v428, %v486
      %v495 = vmin.f32 %v429, %v487
      %v496 = vmin.f32 %v494, %v492
      %v497 = vmin.f32 %v495, %v493
      %v498 = vmin.f32 %v480, %v496
      %v499 = vmin.f32 %v481, %v497
      %v500 = vrot.slane %v498, 7
      %v501 = vrot.slane %v499, 7
      %v502 = vsel %vm252, %v500, %v501
      %v503 = vsel %vm252, %v501, %v500
      %v504 = vsel %vm257, -inf, %v503
      %v505 = vsel %vm258, -inf, %v502
      %v506 = vrot.slane %v498, 1
      %v507 = vrot.slane %v499, 1
      %v508 = vsel %vm263, %v506, %v507
      %v509 = vsel %vm263, %v507, %v506
      %v510 = vsel %vm268, -inf, %v508
      %v511 = vsel %vm269, -inf, %v509
      %v512 = vmax.f32 %v498, %v504
      %v513 = vmax.f32 %v499, %v505
      %v514 = vmax.f32 %v512, %v510
      %v515 = vmax.f32 %v513, %v511
      %516 = vrot.lane.b32.xlu0 %v514, 1
      %v517 = vpop.permute.xlu0 %516
      %518 = vrot.lane.b32.xlu0 %v515, 1
      %v519 = vpop.permute.xlu0 %518
      %v520 = vsel %vm281, -inf, %v517
      %v521 = vsel %vm281, -inf, %v519
      %522 = vrot.lane.b32.xlu0 %v514, 127
      %v523 = vpop.permute.xlu0 %522
      %524 = vrot.lane.b32.xlu0 %v515, 127
      %v525 = vpop.permute.xlu0 %524
      %v526 = vsel %vm289, -inf, %v523
      %v527 = vsel %vm289, -inf, %v525
      %v528 = vmax.f32 %v514, %v520
      %v529 = vmax.f32 %v515, %v521
      %v530 = vmax.f32 %v528, %v526
      %v531 = vmax.f32 %v529, %v527
      %v532 = vsub.f32 %v428, %v530
      %v533 = vsub.f32 %v429, %v531
      %v534 = vmax.f32 %v532, 0.0
      %v535 = vmax.f32 %v533, 0.0
      %v536 = vmul.f32 %v472, %v534
      %v537 = vmul.f32 %v473, %v535
      %v538 = vsub.f32 %v534, %v536
      %v539 = vsub.f32 %v535, %v537
      %v540 = vmax.f32 %v538, 0.0
      %v541 = vmax.f32 %v539, 0.0
      %v542 = vadd.f32 %v472, %v540
      %v543 = vadd.f32 %v473, %v541
      %v544 = vrot.slane %v246, 7
      %v545 = vrot.slane %v247, 7
      %v546 = vsel %vm252, %v544, %v545
      %v547 = vsel %vm252, %v545, %v544
      %v548 = vsel %vm257, inf, %v547
      %v549 = vsel %vm258, inf, %v546
      %v550 = vrot.slane %v246, 1
      %v551 = vrot.slane %v247, 1
      %v552 = vsel %vm263, %v550, %v551
      %v553 = vsel %vm263, %v551, %v550
      %v554 = vsel %vm268, inf, %v552
      %v555 = vsel %vm269, inf, %v553
      %v556 = vmin.f32 %v246, %v548
      %v557 = vmin.f32 %v247, %v549
      %v558 = vmin.f32 %v556, %v554
      %v559 = vmin.f32 %v557, %v555
      %560 = vrot.lane.b32.xlu0 %v246, 1
      %v561 = vpop.permute.xlu0 %560
      %562 = vrot.lane.b32.xlu0 %v247, 1
      %v563 = vpop.permute.xlu0 %562
      %v564 = vsel %vm281, inf, %v561
      %v565 = vsel %vm281, inf, %v563
      %566 = vrot.lane.b32.xlu0 %v246, 127
      %v567 = vpop.permute.xlu0 %566
      %568 = vrot.lane.b32.xlu0 %v247, 127
      %v569 = vpop.permute.xlu0 %568
      %v570 = vsel %vm289, inf, %v567
      %v571 = vsel %vm289, inf, %v569
      %v572 = vmin.f32 %v246, %v564
      %v573 = vmin.f32 %v247, %v565
      %v574 = vmin.f32 %v572, %v570
      %v575 = vmin.f32 %v573, %v571
      %v576 = vmin.f32 %v558, %v574
      %v577 = vmin.f32 %v559, %v575
      %v578 = vrot.slane %v576, 7
      %v579 = vrot.slane %v577, 7
      %v580 = vsel %vm252, %v578, %v579
      %v581 = vsel %vm252, %v579, %v578
      %v582 = vsel %vm257, -inf, %v581
      %v583 = vsel %vm258, -inf, %v580
      %v584 = vrot.slane %v576, 1
      %v585 = vrot.slane %v577, 1
      %v586 = vsel %vm263, %v584, %v585
      %v587 = vsel %vm263, %v585, %v584
      %v588 = vsel %vm268, -inf, %v586
      %v589 = vsel %vm269, -inf, %v587
      %v590 = vmax.f32 %v576, %v582
      %v591 = vmax.f32 %v577, %v583
      %v592 = vmax.f32 %v590, %v588
      %v593 = vmax.f32 %v591, %v589
      %594 = vrot.lane.b32.xlu0 %v592, 1
      %v595 = vpop.permute.xlu0 %594
      %596 = vrot.lane.b32.xlu0 %v593, 1
      %v597 = vpop.permute.xlu0 %596
      %v598 = vsel %vm281, -inf, %v595
      %v599 = vsel %vm281, -inf, %v597
      %600 = vrot.lane.b32.xlu0 %v592, 127
      %v601 = vpop.permute.xlu0 %600
      %602 = vrot.lane.b32.xlu0 %v593, 127
      %v603 = vpop.permute.xlu0 %602
      %v604 = vsel %vm289, -inf, %v601
      %v605 = vsel %vm289, -inf, %v603
      %v606 = vmax.f32 %v592, %v598
      %v607 = vmax.f32 %v593, %v599
      %v608 = vmax.f32 %v606, %v604
      %v609 = vmax.f32 %v607, %v605
      %v610 = vsub.f32 %v246, %v608
      %v611 = vsub.f32 %v247, %v609
      %v612 = vmax.f32 %v610, 0.0
      %v613 = vmax.f32 %v611, 0.0
      %v614 = vsel %vm257, inf, %v581
      %v615 = vsel %vm258, inf, %v580
      %v616 = vsel %vm268, inf, %v586
      %v617 = vsel %vm269, inf, %v587
      %v618 = vmin.f32 %v576, %v614
      %v619 = vmin.f32 %v577, %v615
      %v620 = vmin.f32 %v618, %v616
      %v621 = vmin.f32 %v619, %v617
      %622 = vrot.lane.b32.xlu0 %v576, 1
      %v623 = vpop.permute.xlu0 %622
      %624 = vrot.lane.b32.xlu0 %v577, 1
      %v625 = vpop.permute.xlu0 %624
      %v626 = vsel %vm281, inf, %v623
      %v627 = vsel %vm281, inf, %v625
      %628 = vrot.lane.b32.xlu0 %v576, 127
      %v629 = vpop.permute.xlu0 %628
      %630 = vrot.lane.b32.xlu0 %v577, 127
      %v631 = vpop.permute.xlu0 %630
      %v632 = vsel %vm289, inf, %v629
      %v633 = vsel %vm289, inf, %v631
      %v634 = vmin.f32 %v576, %v626
      %v635 = vmin.f32 %v577, %v627
      %v636 = vmin.f32 %v634, %v632
      %v637 = vmin.f32 %v635, %v633
      %v638 = vmin.f32 %v620, %v636
      %v639 = vmin.f32 %v621, %v637
      %v640 = vrot.slane %v638, 7
      %v641 = vrot.slane %v639, 7
      %v642 = vsel %vm252, %v640, %v641
      %v643 = vsel %vm252, %v641, %v640
      %v644 = vsel %vm257, -inf, %v643
      %v645 = vsel %vm258, -inf, %v642
      %v646 = vrot.slane %v638, 1
      %v647 = vrot.slane %v639, 1
      %v648 = vsel %vm263, %v646, %v647
      %v649 = vsel %vm263, %v647, %v646
      %v650 = vsel %vm268, -inf, %v648
      %v651 = vsel %vm269, -inf, %v649
      %v652 = vmax.f32 %v638, %v644
      %v653 = vmax.f32 %v639, %v645
      %v654 = vmax.f32 %v652, %v650
      %v655 = vmax.f32 %v653, %v651
      %656 = vrot.lane.b32.xlu0 %v654, 1
      %v657 = vpop.permute.xlu0 %656
      %658 = vrot.lane.b32.xlu0 %v655, 1
      %v659 = vpop.permute.xlu0 %658
      %v660 = vsel %vm281, -inf, %v657
      %v661 = vsel %vm281, -inf, %v659
      %662 = vrot.lane.b32.xlu0 %v654, 127
      %v663 = vpop.permute.xlu0 %662
      %664 = vrot.lane.b32.xlu0 %v655, 127
      %v665 = vpop.permute.xlu0 %664
      %v666 = vsel %vm289, -inf, %v663
      %v667 = vsel %vm289, -inf, %v665
      %v668 = vmax.f32 %v654, %v660
      %v669 = vmax.f32 %v655, %v661
      %v670 = vmax.f32 %v668, %v666
      %v671 = vmax.f32 %v669, %v667
      %v672 = vsub.f32 %v576, %v670
      %v673 = vsub.f32 %v577, %v671
      %v674 = vmax.f32 %v672, 0.0
      %v675 = vmax.f32 %v673, 0.0
      %v676 = vmul.f32 %v612, %v674
      %v677 = vmul.f32 %v613, %v675
      %v678 = vsub.f32 %v674, %v676
      %v679 = vsub.f32 %v675, %v677
      %v680 = vmax.f32 %v678, 0.0
      %v681 = vmax.f32 %v679, 0.0
      %v682 = vadd.f32 %v612, %v680
      %v683 = vadd.f32 %v613, %v681
      %v684 = vsel %vm257, inf, %v643
      %v685 = vsel %vm258, inf, %v642
      %v686 = vsel %vm268, inf, %v648
      %v687 = vsel %vm269, inf, %v649
      %v688 = vmin.f32 %v638, %v684
      %v689 = vmin.f32 %v639, %v685
      %v690 = vmin.f32 %v688, %v686
      %v691 = vmin.f32 %v689, %v687
      %692 = vrot.lane.b32.xlu0 %v638, 1
      %v693 = vpop.permute.xlu0 %692
      %694 = vrot.lane.b32.xlu0 %v639, 1
      %v695 = vpop.permute.xlu0 %694
      %v696 = vsel %vm281, inf, %v693
      %v697 = vsel %vm281, inf, %v695
      %698 = vrot.lane.b32.xlu0 %v638, 127
      %v699 = vpop.permute.xlu0 %698
      %700 = vrot.lane.b32.xlu0 %v639, 127
      %v701 = vpop.permute.xlu0 %700
      %v702 = vsel %vm289, inf, %v699
      %v703 = vsel %vm289, inf, %v701
      %v704 = vmin.f32 %v638, %v696
      %v705 = vmin.f32 %v639, %v697
      %v706 = vmin.f32 %v704, %v702
      %v707 = vmin.f32 %v705, %v703
      %v708 = vmin.f32 %v690, %v706
      %v709 = vmin.f32 %v691, %v707
      %v710 = vrot.slane %v708, 7
      %v711 = vrot.slane %v709, 7
      %v712 = vsel %vm252, %v710, %v711
      %v713 = vsel %vm252, %v711, %v710
      %v714 = vsel %vm257, -inf, %v713
      %v715 = vsel %vm258, -inf, %v712
      %v716 = vrot.slane %v708, 1
      %v717 = vrot.slane %v709, 1
      %v718 = vsel %vm263, %v716, %v717
      %v719 = vsel %vm263, %v717, %v716
      %v720 = vsel %vm268, -inf, %v718
      %v721 = vsel %vm269, -inf, %v719
      %v722 = vmax.f32 %v708, %v714
      %v723 = vmax.f32 %v709, %v715
      %v724 = vmax.f32 %v722, %v720
      %v725 = vmax.f32 %v723, %v721
      %726 = vrot.lane.b32.xlu0 %v724, 1
      %v727 = vpop.permute.xlu0 %726
      %728 = vrot.lane.b32.xlu0 %v725, 1
      %v729 = vpop.permute.xlu0 %728
      %v730 = vsel %vm281, -inf, %v727
      %v731 = vsel %vm281, -inf, %v729
      %732 = vrot.lane.b32.xlu0 %v724, 127
      %v733 = vpop.permute.xlu0 %732
      %734 = vrot.lane.b32.xlu0 %v725, 127
      %v735 = vpop.permute.xlu0 %734
      %v736 = vsel %vm289, -inf, %v733
      %v737 = vsel %vm289, -inf, %v735
      %v738 = vmax.f32 %v724, %v730
      %v739 = vmax.f32 %v725, %v731
      %v740 = vmax.f32 %v738, %v736
      %v741 = vmax.f32 %v739, %v737
      %v742 = vsub.f32 %v638, %v740
      %v743 = vsub.f32 %v639, %v741
      %v744 = vmax.f32 %v742, 0.0
      %v745 = vmax.f32 %v743, 0.0
      %v746 = vmul.f32 %v682, %v744
      %v747 = vmul.f32 %v683, %v745
      %v748 = vsub.f32 %v744, %v746
      %v749 = vsub.f32 %v745, %v747
      %v750 = vmax.f32 %v748, 0.0
      %v751 = vmax.f32 %v749, 0.0
      %v752 = vadd.f32 %v682, %v750
      %v753 = vadd.f32 %v683, %v751
      %v754 = vsel %vm257, inf, %v713
      %v755 = vsel %vm258, inf, %v712
      %v756 = vsel %vm268, inf, %v718
      %v757 = vsel %vm269, inf, %v719
      %v758 = vmin.f32 %v708, %v754
      %v759 = vmin.f32 %v709, %v755
      %v760 = vmin.f32 %v758, %v756
      %v761 = vmin.f32 %v759, %v757
      %762 = vrot.lane.b32.xlu0 %v708, 1
      %v763 = vpop.permute.xlu0 %762
      %764 = vrot.lane.b32.xlu0 %v709, 1
      %v765 = vpop.permute.xlu0 %764
      %v766 = vsel %vm281, inf, %v763
      %v767 = vsel %vm281, inf, %v765
      %768 = vrot.lane.b32.xlu0 %v708, 127
      %v769 = vpop.permute.xlu0 %768
      %770 = vrot.lane.b32.xlu0 %v709, 127
      %v771 = vpop.permute.xlu0 %770
      %v772 = vsel %vm289, inf, %v769
      %v773 = vsel %vm289, inf, %v771
      %v774 = vmin.f32 %v708, %v766
      %v775 = vmin.f32 %v709, %v767
      %v776 = vmin.f32 %v774, %v772
      %v777 = vmin.f32 %v775, %v773
      %v778 = vmin.f32 %v760, %v776
      %v779 = vmin.f32 %v761, %v777
      %v780 = vrot.slane %v778, 7
      %v781 = vrot.slane %v779, 7
      %v782 = vsel %vm252, %v780, %v781
      %v783 = vsel %vm252, %v781, %v780
      %v784 = vsel %vm257, -inf, %v783
      %v785 = vsel %vm258, -inf, %v782
      %v786 = vrot.slane %v778, 1
      %v787 = vrot.slane %v779, 1
      %v788 = vsel %vm263, %v786, %v787
      %v789 = vsel %vm263, %v787, %v786
      %v790 = vsel %vm268, -inf, %v788
      %v791 = vsel %vm269, -inf, %v789
      %v792 = vmax.f32 %v778, %v784
      %v793 = vmax.f32 %v779, %v785
      %v794 = vmax.f32 %v792, %v790
      %v795 = vmax.f32 %v793, %v791
      %796 = vrot.lane.b32.xlu0 %v794, 1
      %v797 = vpop.permute.xlu0 %796
      %798 = vrot.lane.b32.xlu0 %v795, 1
      %v799 = vpop.permute.xlu0 %798
      %v800 = vsel %vm281, -inf, %v797
      %v801 = vsel %vm281, -inf, %v799
      %802 = vrot.lane.b32.xlu0 %v794, 127
      %v803 = vpop.permute.xlu0 %802
      %804 = vrot.lane.b32.xlu0 %v795, 127
      %v805 = vpop.permute.xlu0 %804
      %v806 = vsel %vm289, -inf, %v803
      %v807 = vsel %vm289, -inf, %v805
      %v808 = vmax.f32 %v794, %v800
      %v809 = vmax.f32 %v795, %v801
      %v810 = vmax.f32 %v808, %v806
      %v811 = vmax.f32 %v809, %v807
      %v812 = vsub.f32 %v708, %v810
      %v813 = vsub.f32 %v709, %v811
      %v814 = vmax.f32 %v812, 0.0
      %v815 = vmax.f32 %v813, 0.0
      %v816 = vmul.f32 %v752, %v814
      %v817 = vmul.f32 %v753, %v815
      %v818 = vsub.f32 %v814, %v816
      %v819 = vsub.f32 %v815, %v817
      %v820 = vmax.f32 %v818, 0.0
      %v821 = vmax.f32 %v819, 0.0
      %v822 = vadd.f32 %v752, %v820
      %v823 = vadd.f32 %v753, %v821
      %v824 = vmul.f32 %v542, %v246
      %v825 = vmul.f32 %v543, %v247
      %v826 = vadd.f32 %v824, %v825
      %827 = vadd.xlane.f32.xlu0 %v826
      %v828 = vpop.xlane.xlu0 %827
      %v829 = vrot.slane %v828, 4
      %v830 = vadd.f32 %v828, %v829
      %v831 = vrot.slane %v830, 2
      %v832 = vadd.f32 %v830, %v831
      %v833 = vrot.slane %v832, 1
      %v834 = vadd.f32 %v832, %v833
      %s835 = vtos %v834
      %v836 = vadd.f32 %v542, %v543
      %837 = vadd.xlane.f32.xlu0 %v836
      %v838 = vpop.xlane.xlu0 %837
      %v839 = vrot.slane %v838, 4
      %v840 = vadd.f32 %v838, %v839
      %v841 = vrot.slane %v840, 2
      %v842 = vadd.f32 %v840, %v841
      %v843 = vrot.slane %v842, 1
      %v844 = vadd.f32 %v842, %v843
      %s845 = vtos %v844
      %v846 = vmul.f32 %v822, %v248
      %v847 = vmul.f32 %v823, %v249
      %v848 = vadd.f32 %v846, %v847
      %849 = vadd.xlane.f32.xlu0 %v848
      %v850 = vpop.xlane.xlu0 %849
      %v851 = vrot.slane %v850, 4
      %v852 = vadd.f32 %v850, %v851
      %v853 = vrot.slane %v852, 2
      %v854 = vadd.f32 %v852, %v853
      %v855 = vrot.slane %v854, 1
      %v856 = vadd.f32 %v854, %v855
      %s857 = vtos %v856
      %v858 = vadd.f32 %v822, %v823
      %859 = vadd.xlane.f32.xlu0 %v858
      %v860 = vpop.xlane.xlu0 %859
      %v861 = vrot.slane %v860, 4
      %v862 = vadd.f32 %v860, %v861
      %v863 = vrot.slane %v862, 2
      %v864 = vadd.f32 %v862, %v863
      %v865 = vrot.slane %v864, 1
      %v866 = vadd.f32 %v864, %v865
      %s867 = vtos %v866
      %vm868 = vcmp.eq.s32.totalorder %v227, 0
      %vm869 = vcmp.eq.s32.totalorder %v227, 1
      %vm870 = vcmp.eq.s32.totalorder %v227, 2
      %v871 = vstv %s857
      %v872 = vstv %s867
      %v873 = vsel %vm870, %v871, %v872
      %v874 = vstv %s845
      %v875 = vsel %vm869, %v874, %v873
      %v876 = vstv %s835
      %v877 = vsel %vm868, %v876, %v875
      %vm878 = vcmask 24576
      %879 = vst.msk [vmem:[%s197] sm:$0x1] %vm878, %v877
      %s880 = sadd.s32 %s17, %s18
      %p881 = scmp.lt.s32.totalorder %s880, 1
      %s882 = scalar_select %p881, %s880, 1
      %s883 = scalar_lea.vmem %s2, %s882
      // Predicated region
      $region29: #{soft_cldice.1} parent=27 // pred_check
        %p884 = pneg %p101
      $region30: #{soft_cldice.1} parent=27 // pred_check_branch
        %886 = sbr.rel (%p884) target = $region32
      $region31: #{soft_cldice.1} parent=27 // pred_region
        %s887 = sadd.s32 %s17, %s18
      $region32: #{soft_cldice.1} parent=27 // pred_fallthru
        _
    $region28: #{soft_cldice.1} parent=5 // pred_fallthru
      _
    %p888 = scmp.le.s32.totalorder 2, %s8
    // Predicated region
    $region33: #{soft_cldice.1} parent=5 // pred_check
      %p889 = pneg %p888
    $region34: #{soft_cldice.1} parent=5 // pred_check_branch
      %891 = sbr.rel (%p889) target = $region36
    $region35: #{soft_cldice.1} parent=5 // pred_region
      %s892 = ssub.s32 %s8, 2
      // Predicated region
      $region37: #{soft_cldice.1} parent=35 // pred_check
        %p893 = pneg %p107
      $region38: #{soft_cldice.1} parent=35 // pred_check_branch
        %895 = sbr.rel (%p893) target = $region40
      $region39: #{soft_cldice.1} parent=35 // pred_region
        %s896 = sadd.s32 %s19, %s20
        %p897 = scmp.lt.s32.totalorder %s896, 1
        %s898 = scalar_select %p897, %s896, 1
        %s899 = scalar_lea.vmem %s2, %s898
      $region40: #{soft_cldice.1} parent=35 // pred_fallthru
        _
    $region36: #{soft_cldice.1} parent=5 // pred_fallthru
      _
  $region6: #{soft_cldice.1} parent=0 // loop_footer
    %s12 = sadd.s32 1, %s8
  $region7: #{soft_cldice.1} parent=0 // loop_footer_branch
    %7 = sbr.rel target = $region3
  $region8: #{soft_cldice.1} parent=0 // loop_exit
    _

</llo_original>
